<compile_context>
chip_gen: v5e
topology: v5e:2x2
jax: 0.10.0
libtpu: 0.0.40
codegen_flags: <defaults>
</compile_context>

<pallas_src>
import functools

import jax
import jax.numpy as jnp
from jax import lax
from jax.experimental import pallas as pl
from jax.experimental.pallas import tpu as pltpu

KH = KW = 3  # fixed 3x3 kernel, stride 1, padding 1


def _outconv_kernel(x_ref, w_ref, b_ref, o_ref, *, N, H, W, Cin, Cout):
    # x_ref: (N, Cin, H+2, W+2)  zero-padded input, VMEM
    # w_ref: (Cout*Cin*9,)       flattened weights, SMEM
    #                            index = ((co*Cin + ci)*3 + kh)*3 + kw
    # b_ref: (Cout,)             bias, SMEM
    # o_ref: (N, Cout, H, W)     output, VMEM
    accs = [jnp.full((N, 1, H, W), b_ref[co], jnp.float32) for co in range(Cout)]
    for ci in range(Cin):
        for kh in range(KH):
            for kw in range(KW):
                # Statically shifted window; loaded once, reused for all Cout.
                patch = x_ref[:, pl.ds(ci, 1), pl.ds(kh, H), pl.ds(kw, W)]
                patch = patch.astype(jnp.float32)
                for co in range(Cout):
                    w_val = w_ref[((co * Cin + ci) * KH + kh) * KW + kw]
                    accs[co] = accs[co] + w_val * patch
    for co in range(Cout):
        o_ref[:, pl.ds(co, 1), :, :] = accs[co].astype(o_ref.dtype)


def outconv(x_nchw, weight, bias):
    """x_nchw: (N, Cin, H, W); weight: (Cout, Cin, 3, 3); bias: (Cout,)."""
    N, Cin, H, W = x_nchw.shape
    Cout = weight.shape[0]

    # Only remaining glue: zero-pad H/W by 1 (one small XLA pass).  No
    # transposes / reshuffles on input or output.
    x_pad = jnp.pad(x_nchw, ((0, 0), (0, 0), (1, 1), (1, 1)))
    w_flat = weight.reshape(-1)  # contiguous reshape, effectively free

    kern = functools.partial(_outconv_kernel, N=N, H=H, W=W, Cin=Cin, Cout=Cout)

    # TODO(synk): for large images (padded image approaching the VMEM limit,
    # especially v7x's 64 MiB), add a row-tile grid axis with a 2-row halo.
    return pl.pallas_call(
        kern,
        out_shape=jax.ShapeDtypeStruct((N, Cout, H, W), x_nchw.dtype),
        in_specs=[
            pl.BlockSpec(memory_space=pltpu.MemorySpace.VMEM),   # padded x
            pl.BlockSpec(memory_space=pltpu.MemorySpace.SMEM),   # weights
            pl.BlockSpec(memory_space=pltpu.MemorySpace.SMEM),   # bias
        ],
        out_specs=pl.BlockSpec(memory_space=pltpu.MemorySpace.VMEM),
    )(x_pad, w_flat, bias)


if __name__ == "__main__":
    key = jax.random.PRNGKey(0)
    k1, k2, k3 = jax.random.split(key, 3)

    N, Cin, H, W, Cout = 2, 4, 16, 16, 3
    x = jax.random.normal(k1, (N, Cin, H, W), jnp.float32)

    # Deterministic synthetic parameters (Conv2d-like uniform init).
    fan_in = Cin * KH * KW
    bound = float(1.0 / (fan_in ** 0.5))
    weight = jax.random.uniform(k2, (Cout, Cin, KH, KW), jnp.float32,
                                -bound, bound)
    bias = jax.random.uniform(k3, (Cout,), jnp.float32, -bound, bound)

    y = jax.block_until_ready(outconv(x, weight, bias))

    # Sanity check against XLA's conv (same semantics as nn.Conv2d(3,1,1)).
    y_ref = lax.conv_general_dilated(
        x, weight, window_strides=(1, 1), padding=((1, 1), (1, 1)),
        dimension_numbers=("NCHW", "OIHW", "NCHW"),
    ) + bias[None, :, None, None]

    assert y.shape == (N, Cout, H, W)
    assert jnp.allclose(y, y_ref, atol=1e-5, rtol=1e-5)
    print("KERNEL_OK")
</pallas_src>

<mosaic_0001>
module attributes {stable_mosaic.version = 11 : i64} {
  func.func @_outconv_kernel(%arg0: memref<2x4x18x18xf32, #tpu.memory_space<vmem>>, %arg1: memref<108xf32, #tpu.memory_space<smem>>, %arg2: memref<3xf32, #tpu.memory_space<smem>>, %arg3: memref<2x3x16x16xf32, #tpu.memory_space<vmem>>) attributes {dimension_semantics = [], scalar_prefetch = 0 : i64, scratch_operands = 0 : i64, tpu.core_type = #tpu.core_type<tc>} {
    %c0 = arith.constant 0 : index
    %0 = memref.load %arg2[%c0] : memref<3xf32, #tpu.memory_space<smem>>
    %1 = vector.broadcast %0 : f32 to vector<2x1x16x16xf32>
    %c1 = arith.constant 1 : index
    %2 = memref.load %arg2[%c1] : memref<3xf32, #tpu.memory_space<smem>>
    %3 = vector.broadcast %2 : f32 to vector<2x1x16x16xf32>
    %c2 = arith.constant 2 : index
    %4 = memref.load %arg2[%c2] : memref<3xf32, #tpu.memory_space<smem>>
    %5 = vector.broadcast %4 : f32 to vector<2x1x16x16xf32>
    %c0_0 = arith.constant 0 : index
    %c0_1 = arith.constant 0 : index
    %c0_2 = arith.constant 0 : index
    %c0_3 = arith.constant 0 : index
    %6 = vector.load %arg0[%c0_0, %c0_1, %c0_2, %c0_3] : memref<2x4x18x18xf32, #tpu.memory_space<vmem>>, vector<2x1x16x16xf32>
    %c0_4 = arith.constant 0 : index
    %7 = memref.load %arg1[%c0_4] : memref<108xf32, #tpu.memory_space<smem>>
    %8 = vector.broadcast %7 : f32 to vector<2x1x16x16xf32>
    %9 = arith.mulf %8, %6 : vector<2x1x16x16xf32>
    %10 = arith.addf %1, %9 : vector<2x1x16x16xf32>
    %c36 = arith.constant 36 : index
    %11 = memref.load %arg1[%c36] : memref<108xf32, #tpu.memory_space<smem>>
    %12 = vector.broadcast %11 : f32 to vector<2x1x16x16xf32>
    %13 = arith.mulf %12, %6 : vector<2x1x16x16xf32>
    %14 = arith.addf %3, %13 : vector<2x1x16x16xf32>
    %c72 = arith.constant 72 : index
    %15 = memref.load %arg1[%c72] : memref<108xf32, #tpu.memory_space<smem>>
    %16 = vector.broadcast %15 : f32 to vector<2x1x16x16xf32>
    %17 = arith.mulf %16, %6 : vector<2x1x16x16xf32>
    %18 = arith.addf %5, %17 : vector<2x1x16x16xf32>
    %c0_5 = arith.constant 0 : index
    %c0_6 = arith.constant 0 : index
    %c0_7 = arith.constant 0 : index
    %c1_8 = arith.constant 1 : index
    %19 = vector.load %arg0[%c0_5, %c0_6, %c0_7, %c1_8] : memref<2x4x18x18xf32, #tpu.memory_space<vmem>>, vector<2x1x16x16xf32>
    %c1_9 = arith.constant 1 : index
    %20 = memref.load %arg1[%c1_9] : memref<108xf32, #tpu.memory_space<smem>>
    %21 = vector.broadcast %20 : f32 to vector<2x1x16x16xf32>
    %22 = arith.mulf %21, %19 : vector<2x1x16x16xf32>
    %23 = arith.addf %10, %22 : vector<2x1x16x16xf32>
    %c37 = arith.constant 37 : index
    %24 = memref.load %arg1[%c37] : memref<108xf32, #tpu.memory_space<smem>>
    %25 = vector.broadcast %24 : f32 to vector<2x1x16x16xf32>
    %26 = arith.mulf %25, %19 : vector<2x1x16x16xf32>
    %27 = arith.addf %14, %26 : vector<2x1x16x16xf32>
    %c73 = arith.constant 73 : index
    %28 = memref.load %arg1[%c73] : memref<108xf32, #tpu.memory_space<smem>>
    %29 = vector.broadcast %28 : f32 to vector<2x1x16x16xf32>
    %30 = arith.mulf %29, %19 : vector<2x1x16x16xf32>
    %31 = arith.addf %18, %30 : vector<2x1x16x16xf32>
    %c0_10 = arith.constant 0 : index
    %c0_11 = arith.constant 0 : index
    %c0_12 = arith.constant 0 : index
    %c2_13 = arith.constant 2 : index
    %32 = vector.load %arg0[%c0_10, %c0_11, %c0_12, %c2_13] : memref<2x4x18x18xf32, #tpu.memory_space<vmem>>, vector<2x1x16x16xf32>
    %c2_14 = arith.constant 2 : index
    %33 = memref.load %arg1[%c2_14] : memref<108xf32, #tpu.memory_space<smem>>
    %34 = vector.broadcast %33 : f32 to vector<2x1x16x16xf32>
    %35 = arith.mulf %34, %32 : vector<2x1x16x16xf32>
    %36 = arith.addf %23, %35 : vector<2x1x16x16xf32>
    %c38 = arith.constant 38 : index
    %37 = memref.load %arg1[%c38] : memref<108xf32, #tpu.memory_space<smem>>
    %38 = vector.broadcast %37 : f32 to vector<2x1x16x16xf32>
    %39 = arith.mulf %38, %32 : vector<2x1x16x16xf32>
    %40 = arith.addf %27, %39 : vector<2x1x16x16xf32>
    %c74 = arith.constant 74 : index
    %41 = memref.load %arg1[%c74] : memref<108xf32, #tpu.memory_space<smem>>
    %42 = vector.broadcast %41 : f32 to vector<2x1x16x16xf32>
    %43 = arith.mulf %42, %32 : vector<2x1x16x16xf32>
    %44 = arith.addf %31, %43 : vector<2x1x16x16xf32>
    %c0_15 = arith.constant 0 : index
    %c0_16 = arith.constant 0 : index
    %c1_17 = arith.constant 1 : index
    %c0_18 = arith.constant 0 : index
    %45 = vector.load %arg0[%c0_15, %c0_16, %c1_17, %c0_18] : memref<2x4x18x18xf32, #tpu.memory_space<vmem>>, vector<2x1x16x16xf32>
    %c3 = arith.constant 3 : index
    %46 = memref.load %arg1[%c3] : memref<108xf32, #tpu.memory_space<smem>>
    %47 = vector.broadcast %46 : f32 to vector<2x1x16x16xf32>
    %48 = arith.mulf %47, %45 : vector<2x1x16x16xf32>
    %49 = arith.addf %36, %48 : vector<2x1x16x16xf32>
    %c39 = arith.constant 39 : index
    %50 = memref.load %arg1[%c39] : memref<108xf32, #tpu.memory_space<smem>>
    %51 = vector.broadcast %50 : f32 to vector<2x1x16x16xf32>
    %52 = arith.mulf %51, %45 : vector<2x1x16x16xf32>
    %53 = arith.addf %40, %52 : vector<2x1x16x16xf32>
    %c75 = arith.constant 75 : index
    %54 = memref.load %arg1[%c75] : memref<108xf32, #tpu.memory_space<smem>>
    %55 = vector.broadcast %54 : f32 to vector<2x1x16x16xf32>
    %56 = arith.mulf %55, %45 : vector<2x1x16x16xf32>
    %57 = arith.addf %44, %56 : vector<2x1x16x16xf32>
    %c0_19 = arith.constant 0 : index
    %c0_20 = arith.constant 0 : index
    %c1_21 = arith.constant 1 : index
    %c1_22 = arith.constant 1 : index
    %58 = vector.load %arg0[%c0_19, %c0_20, %c1_21, %c1_22] : memref<2x4x18x18xf32, #tpu.memory_space<vmem>>, vector<2x1x16x16xf32>
    %c4 = arith.constant 4 : index
    %59 = memref.load %arg1[%c4] : memref<108xf32, #tpu.memory_space<smem>>
    %60 = vector.broadcast %59 : f32 to vector<2x1x16x16xf32>
    %61 = arith.mulf %60, %58 : vector<2x1x16x16xf32>
    %62 = arith.addf %49, %61 : vector<2x1x16x16xf32>
    %c40 = arith.constant 40 : index
    %63 = memref.load %arg1[%c40] : memref<108xf32, #tpu.memory_space<smem>>
    %64 = vector.broadcast %63 : f32 to vector<2x1x16x16xf32>
    %65 = arith.mulf %64, %58 : vector<2x1x16x16xf32>
    %66 = arith.addf %53, %65 : vector<2x1x16x16xf32>
    %c76 = arith.constant 76 : index
    %67 = memref.load %arg1[%c76] : memref<108xf32, #tpu.memory_space<smem>>
    %68 = vector.broadcast %67 : f32 to vector<2x1x16x16xf32>
    %69 = arith.mulf %68, %58 : vector<2x1x16x16xf32>
    %70 = arith.addf %57, %69 : vector<2x1x16x16xf32>
    %c0_23 = arith.constant 0 : index
    %c0_24 = arith.constant 0 : index
    %c1_25 = arith.constant 1 : index
    %c2_26 = arith.constant 2 : index
    %71 = vector.load %arg0[%c0_23, %c0_24, %c1_25, %c2_26] : memref<2x4x18x18xf32, #tpu.memory_space<vmem>>, vector<2x1x16x16xf32>
    %c5 = arith.constant 5 : index
    %72 = memref.load %arg1[%c5] : memref<108xf32, #tpu.memory_space<smem>>
    %73 = vector.broadcast %72 : f32 to vector<2x1x16x16xf32>
    %74 = arith.mulf %73, %71 : vector<2x1x16x16xf32>
    %75 = arith.addf %62, %74 : vector<2x1x16x16xf32>
    %c41 = arith.constant 41 : index
    %76 = memref.load %arg1[%c41] : memref<108xf32, #tpu.memory_space<smem>>
    %77 = vector.broadcast %76 : f32 to vector<2x1x16x16xf32>
    %78 = arith.mulf %77, %71 : vector<2x1x16x16xf32>
    %79 = arith.addf %66, %78 : vector<2x1x16x16xf32>
    %c77 = arith.constant 77 : index
    %80 = memref.load %arg1[%c77] : memref<108xf32, #tpu.memory_space<smem>>
    %81 = vector.broadcast %80 : f32 to vector<2x1x16x16xf32>
    %82 = arith.mulf %81, %71 : vector<2x1x16x16xf32>
    %83 = arith.addf %70, %82 : vector<2x1x16x16xf32>
    %c0_27 = arith.constant 0 : index
    %c0_28 = arith.constant 0 : index
    %c2_29 = arith.constant 2 : index
    %c0_30 = arith.constant 0 : index
    %84 = vector.load %arg0[%c0_27, %c0_28, %c2_29, %c0_30] : memref<2x4x18x18xf32, #tpu.memory_space<vmem>>, vector<2x1x16x16xf32>
    %c6 = arith.constant 6 : index
    %85 = memref.load %arg1[%c6] : memref<108xf32, #tpu.memory_space<smem>>
    %86 = vector.broadcast %85 : f32 to vector<2x1x16x16xf32>
    %87 = arith.mulf %86, %84 : vector<2x1x16x16xf32>
    %88 = arith.addf %75, %87 : vector<2x1x16x16xf32>
    %c42 = arith.constant 42 : index
    %89 = memref.load %arg1[%c42] : memref<108xf32, #tpu.memory_space<smem>>
    %90 = vector.broadcast %89 : f32 to vector<2x1x16x16xf32>
    %91 = arith.mulf %90, %84 : vector<2x1x16x16xf32>
    %92 = arith.addf %79, %91 : vector<2x1x16x16xf32>
    %c78 = arith.constant 78 : index
    %93 = memref.load %arg1[%c78] : memref<108xf32, #tpu.memory_space<smem>>
    %94 = vector.broadcast %93 : f32 to vector<2x1x16x16xf32>
    %95 = arith.mulf %94, %84 : vector<2x1x16x16xf32>
    %96 = arith.addf %83, %95 : vector<2x1x16x16xf32>
    %c0_31 = arith.constant 0 : index
    %c0_32 = arith.constant 0 : index
    %c2_33 = arith.constant 2 : index
    %c1_34 = arith.constant 1 : index
    %97 = vector.load %arg0[%c0_31, %c0_32, %c2_33, %c1_34] : memref<2x4x18x18xf32, #tpu.memory_space<vmem>>, vector<2x1x16x16xf32>
    %c7 = arith.constant 7 : index
    %98 = memref.load %arg1[%c7] : memref<108xf32, #tpu.memory_space<smem>>
    %99 = vector.broadcast %98 : f32 to vector<2x1x16x16xf32>
    %100 = arith.mulf %99, %97 : vector<2x1x16x16xf32>
    %101 = arith.addf %88, %100 : vector<2x1x16x16xf32>
    %c43 = arith.constant 43 : index
    %102 = memref.load %arg1[%c43] : memref<108xf32, #tpu.memory_space<smem>>
    %103 = vector.broadcast %102 : f32 to vector<2x1x16x16xf32>
    %104 = arith.mulf %103, %97 : vector<2x1x16x16xf32>
    %105 = arith.addf %92, %104 : vector<2x1x16x16xf32>
    %c79 = arith.constant 79 : index
    %106 = memref.load %arg1[%c79] : memref<108xf32, #tpu.memory_space<smem>>
    %107 = vector.broadcast %106 : f32 to vector<2x1x16x16xf32>
    %108 = arith.mulf %107, %97 : vector<2x1x16x16xf32>
    %109 = arith.addf %96, %108 : vector<2x1x16x16xf32>
    %c0_35 = arith.constant 0 : index
    %c0_36 = arith.constant 0 : index
    %c2_37 = arith.constant 2 : index
    %c2_38 = arith.constant 2 : index
    %110 = vector.load %arg0[%c0_35, %c0_36, %c2_37, %c2_38] : memref<2x4x18x18xf32, #tpu.memory_space<vmem>>, vector<2x1x16x16xf32>
    %c8 = arith.constant 8 : index
    %111 = memref.load %arg1[%c8] : memref<108xf32, #tpu.memory_space<smem>>
    %112 = vector.broadcast %111 : f32 to vector<2x1x16x16xf32>
    %113 = arith.mulf %112, %110 : vector<2x1x16x16xf32>
    %114 = arith.addf %101, %113 : vector<2x1x16x16xf32>
    %c44 = arith.constant 44 : index
    %115 = memref.load %arg1[%c44] : memref<108xf32, #tpu.memory_space<smem>>
    %116 = vector.broadcast %115 : f32 to vector<2x1x16x16xf32>
    %117 = arith.mulf %116, %110 : vector<2x1x16x16xf32>
    %118 = arith.addf %105, %117 : vector<2x1x16x16xf32>
    %c80 = arith.constant 80 : index
    %119 = memref.load %arg1[%c80] : memref<108xf32, #tpu.memory_space<smem>>
    %120 = vector.broadcast %119 : f32 to vector<2x1x16x16xf32>
    %121 = arith.mulf %120, %110 : vector<2x1x16x16xf32>
    %122 = arith.addf %109, %121 : vector<2x1x16x16xf32>
    %c0_39 = arith.constant 0 : index
    %c1_40 = arith.constant 1 : index
    %c0_41 = arith.constant 0 : index
    %c0_42 = arith.constant 0 : index
    %123 = vector.load %arg0[%c0_39, %c1_40, %c0_41, %c0_42] : memref<2x4x18x18xf32, #tpu.memory_space<vmem>>, vector<2x1x16x16xf32>
    %c9 = arith.constant 9 : index
    %124 = memref.load %arg1[%c9] : memref<108xf32, #tpu.memory_space<smem>>
    %125 = vector.broadcast %124 : f32 to vector<2x1x16x16xf32>
    %126 = arith.mulf %125, %123 : vector<2x1x16x16xf32>
    %127 = arith.addf %114, %126 : vector<2x1x16x16xf32>
    %c45 = arith.constant 45 : index
    %128 = memref.load %arg1[%c45] : memref<108xf32, #tpu.memory_space<smem>>
    %129 = vector.broadcast %128 : f32 to vector<2x1x16x16xf32>
    %130 = arith.mulf %129, %123 : vector<2x1x16x16xf32>
    %131 = arith.addf %118, %130 : vector<2x1x16x16xf32>
    %c81 = arith.constant 81 : index
    %132 = memref.load %arg1[%c81] : memref<108xf32, #tpu.memory_space<smem>>
    %133 = vector.broadcast %132 : f32 to vector<2x1x16x16xf32>
    %134 = arith.mulf %133, %123 : vector<2x1x16x16xf32>
    %135 = arith.addf %122, %134 : vector<2x1x16x16xf32>
    %c0_43 = arith.constant 0 : index
    %c1_44 = arith.constant 1 : index
    %c0_45 = arith.constant 0 : index
    %c1_46 = arith.constant 1 : index
    %136 = vector.load %arg0[%c0_43, %c1_44, %c0_45, %c1_46] : memref<2x4x18x18xf32, #tpu.memory_space<vmem>>, vector<2x1x16x16xf32>
    %c10 = arith.constant 10 : index
    %137 = memref.load %arg1[%c10] : memref<108xf32, #tpu.memory_space<smem>>
    %138 = vector.broadcast %137 : f32 to vector<2x1x16x16xf32>
    %139 = arith.mulf %138, %136 : vector<2x1x16x16xf32>
    %140 = arith.addf %127, %139 : vector<2x1x16x16xf32>
    %c46 = arith.constant 46 : index
    %141 = memref.load %arg1[%c46] : memref<108xf32, #tpu.memory_space<smem>>
    %142 = vector.broadcast %141 : f32 to vector<2x1x16x16xf32>
    %143 = arith.mulf %142, %136 : vector<2x1x16x16xf32>
    %144 = arith.addf %131, %143 : vector<2x1x16x16xf32>
    %c82 = arith.constant 82 : index
    %145 = memref.load %arg1[%c82] : memref<108xf32, #tpu.memory_space<smem>>
    %146 = vector.broadcast %145 : f32 to vector<2x1x16x16xf32>
    %147 = arith.mulf %146, %136 : vector<2x1x16x16xf32>
    %148 = arith.addf %135, %147 : vector<2x1x16x16xf32>
    %c0_47 = arith.constant 0 : index
    %c1_48 = arith.constant 1 : index
    %c0_49 = arith.constant 0 : index
    %c2_50 = arith.constant 2 : index
    %149 = vector.load %arg0[%c0_47, %c1_48, %c0_49, %c2_50] : memref<2x4x18x18xf32, #tpu.memory_space<vmem>>, vector<2x1x16x16xf32>
    %c11 = arith.constant 11 : index
    %150 = memref.load %arg1[%c11] : memref<108xf32, #tpu.memory_space<smem>>
    %151 = vector.broadcast %150 : f32 to vector<2x1x16x16xf32>
    %152 = arith.mulf %151, %149 : vector<2x1x16x16xf32>
    %153 = arith.addf %140, %152 : vector<2x1x16x16xf32>
    %c47 = arith.constant 47 : index
    %154 = memref.load %arg1[%c47] : memref<108xf32, #tpu.memory_space<smem>>
    %155 = vector.broadcast %154 : f32 to vector<2x1x16x16xf32>
    %156 = arith.mulf %155, %149 : vector<2x1x16x16xf32>
    %157 = arith.addf %144, %156 : vector<2x1x16x16xf32>
    %c83 = arith.constant 83 : index
    %158 = memref.load %arg1[%c83] : memref<108xf32, #tpu.memory_space<smem>>
    %159 = vector.broadcast %158 : f32 to vector<2x1x16x16xf32>
    %160 = arith.mulf %159, %149 : vector<2x1x16x16xf32>
    %161 = arith.addf %148, %160 : vector<2x1x16x16xf32>
    %c0_51 = arith.constant 0 : index
    %c1_52 = arith.constant 1 : index
    %c1_53 = arith.constant 1 : index
    %c0_54 = arith.constant 0 : index
    %162 = vector.load %arg0[%c0_51, %c1_52, %c1_53, %c0_54] : memref<2x4x18x18xf32, #tpu.memory_space<vmem>>, vector<2x1x16x16xf32>
    %c12 = arith.constant 12 : index
    %163 = memref.load %arg1[%c12] : memref<108xf32, #tpu.memory_space<smem>>
    %164 = vector.broadcast %163 : f32 to vector<2x1x16x16xf32>
    %165 = arith.mulf %164, %162 : vector<2x1x16x16xf32>
    %166 = arith.addf %153, %165 : vector<2x1x16x16xf32>
    %c48 = arith.constant 48 : index
    %167 = memref.load %arg1[%c48] : memref<108xf32, #tpu.memory_space<smem>>
    %168 = vector.broadcast %167 : f32 to vector<2x1x16x16xf32>
    %169 = arith.mulf %168, %162 : vector<2x1x16x16xf32>
    %170 = arith.addf %157, %169 : vector<2x1x16x16xf32>
    %c84 = arith.constant 84 : index
    %171 = memref.load %arg1[%c84] : memref<108xf32, #tpu.memory_space<smem>>
    %172 = vector.broadcast %171 : f32 to vector<2x1x16x16xf32>
    %173 = arith.mulf %172, %162 : vector<2x1x16x16xf32>
    %174 = arith.addf %161, %173 : vector<2x1x16x16xf32>
    %c0_55 = arith.constant 0 : index
    %c1_56 = arith.constant 1 : index
    %c1_57 = arith.constant 1 : index
    %c1_58 = arith.constant 1 : index
    %175 = vector.load %arg0[%c0_55, %c1_56, %c1_57, %c1_58] : memref<2x4x18x18xf32, #tpu.memory_space<vmem>>, vector<2x1x16x16xf32>
    %c13 = arith.constant 13 : index
    %176 = memref.load %arg1[%c13] : memref<108xf32, #tpu.memory_space<smem>>
    %177 = vector.broadcast %176 : f32 to vector<2x1x16x16xf32>
    %178 = arith.mulf %177, %175 : vector<2x1x16x16xf32>
    %179 = arith.addf %166, %178 : vector<2x1x16x16xf32>
    %c49 = arith.constant 49 : index
    %180 = memref.load %arg1[%c49] : memref<108xf32, #tpu.memory_space<smem>>
    %181 = vector.broadcast %180 : f32 to vector<2x1x16x16xf32>
    %182 = arith.mulf %181, %175 : vector<2x1x16x16xf32>
    %183 = arith.addf %170, %182 : vector<2x1x16x16xf32>
    %c85 = arith.constant 85 : index
    %184 = memref.load %arg1[%c85] : memref<108xf32, #tpu.memory_space<smem>>
    %185 = vector.broadcast %184 : f32 to vector<2x1x16x16xf32>
    %186 = arith.mulf %185, %175 : vector<2x1x16x16xf32>
    %187 = arith.addf %174, %186 : vector<2x1x16x16xf32>
    %c0_59 = arith.constant 0 : index
    %c1_60 = arith.constant 1 : index
    %c1_61 = arith.constant 1 : index
    %c2_62 = arith.constant 2 : index
    %188 = vector.load %arg0[%c0_59, %c1_60, %c1_61, %c2_62] : memref<2x4x18x18xf32, #tpu.memory_space<vmem>>, vector<2x1x16x16xf32>
    %c14 = arith.constant 14 : index
    %189 = memref.load %arg1[%c14] : memref<108xf32, #tpu.memory_space<smem>>
    %190 = vector.broadcast %189 : f32 to vector<2x1x16x16xf32>
    %191 = arith.mulf %190, %188 : vector<2x1x16x16xf32>
    %192 = arith.addf %179, %191 : vector<2x1x16x16xf32>
    %c50 = arith.constant 50 : index
    %193 = memref.load %arg1[%c50] : memref<108xf32, #tpu.memory_space<smem>>
    %194 = vector.broadcast %193 : f32 to vector<2x1x16x16xf32>
    %195 = arith.mulf %194, %188 : vector<2x1x16x16xf32>
    %196 = arith.addf %183, %195 : vector<2x1x16x16xf32>
    %c86 = arith.constant 86 : index
    %197 = memref.load %arg1[%c86] : memref<108xf32, #tpu.memory_space<smem>>
    %198 = vector.broadcast %197 : f32 to vector<2x1x16x16xf32>
    %199 = arith.mulf %198, %188 : vector<2x1x16x16xf32>
    %200 = arith.addf %187, %199 : vector<2x1x16x16xf32>
    %c0_63 = arith.constant 0 : index
    %c1_64 = arith.constant 1 : index
    %c2_65 = arith.constant 2 : index
    %c0_66 = arith.constant 0 : index
    %201 = vector.load %arg0[%c0_63, %c1_64, %c2_65, %c0_66] : memref<2x4x18x18xf32, #tpu.memory_space<vmem>>, vector<2x1x16x16xf32>
    %c15 = arith.constant 15 : index
    %202 = memref.load %arg1[%c15] : memref<108xf32, #tpu.memory_space<smem>>
    %203 = vector.broadcast %202 : f32 to vector<2x1x16x16xf32>
    %204 = arith.mulf %203, %201 : vector<2x1x16x16xf32>
    %205 = arith.addf %192, %204 : vector<2x1x16x16xf32>
    %c51 = arith.constant 51 : index
    %206 = memref.load %arg1[%c51] : memref<108xf32, #tpu.memory_space<smem>>
    %207 = vector.broadcast %206 : f32 to vector<2x1x16x16xf32>
    %208 = arith.mulf %207, %201 : vector<2x1x16x16xf32>
    %209 = arith.addf %196, %208 : vector<2x1x16x16xf32>
    %c87 = arith.constant 87 : index
    %210 = memref.load %arg1[%c87] : memref<108xf32, #tpu.memory_space<smem>>
    %211 = vector.broadcast %210 : f32 to vector<2x1x16x16xf32>
    %212 = arith.mulf %211, %201 : vector<2x1x16x16xf32>
    %213 = arith.addf %200, %212 : vector<2x1x16x16xf32>
    %c0_67 = arith.constant 0 : index
    %c1_68 = arith.constant 1 : index
    %c2_69 = arith.constant 2 : index
    %c1_70 = arith.constant 1 : index
    %214 = vector.load %arg0[%c0_67, %c1_68, %c2_69, %c1_70] : memref<2x4x18x18xf32, #tpu.memory_space<vmem>>, vector<2x1x16x16xf32>
    %c16 = arith.constant 16 : index
    %215 = memref.load %arg1[%c16] : memref<108xf32, #tpu.memory_space<smem>>
    %216 = vector.broadcast %215 : f32 to vector<2x1x16x16xf32>
    %217 = arith.mulf %216, %214 : vector<2x1x16x16xf32>
    %218 = arith.addf %205, %217 : vector<2x1x16x16xf32>
    %c52 = arith.constant 52 : index
    %219 = memref.load %arg1[%c52] : memref<108xf32, #tpu.memory_space<smem>>
    %220 = vector.broadcast %219 : f32 to vector<2x1x16x16xf32>
    %221 = arith.mulf %220, %214 : vector<2x1x16x16xf32>
    %222 = arith.addf %209, %221 : vector<2x1x16x16xf32>
    %c88 = arith.constant 88 : index
    %223 = memref.load %arg1[%c88] : memref<108xf32, #tpu.memory_space<smem>>
    %224 = vector.broadcast %223 : f32 to vector<2x1x16x16xf32>
    %225 = arith.mulf %224, %214 : vector<2x1x16x16xf32>
    %226 = arith.addf %213, %225 : vector<2x1x16x16xf32>
    %c0_71 = arith.constant 0 : index
    %c1_72 = arith.constant 1 : index
    %c2_73 = arith.constant 2 : index
    %c2_74 = arith.constant 2 : index
    %227 = vector.load %arg0[%c0_71, %c1_72, %c2_73, %c2_74] : memref<2x4x18x18xf32, #tpu.memory_space<vmem>>, vector<2x1x16x16xf32>
    %c17 = arith.constant 17 : index
    %228 = memref.load %arg1[%c17] : memref<108xf32, #tpu.memory_space<smem>>
    %229 = vector.broadcast %228 : f32 to vector<2x1x16x16xf32>
    %230 = arith.mulf %229, %227 : vector<2x1x16x16xf32>
    %231 = arith.addf %218, %230 : vector<2x1x16x16xf32>
    %c53 = arith.constant 53 : index
    %232 = memref.load %arg1[%c53] : memref<108xf32, #tpu.memory_space<smem>>
    %233 = vector.broadcast %232 : f32 to vector<2x1x16x16xf32>
    %234 = arith.mulf %233, %227 : vector<2x1x16x16xf32>
    %235 = arith.addf %222, %234 : vector<2x1x16x16xf32>
    %c89 = arith.constant 89 : index
    %236 = memref.load %arg1[%c89] : memref<108xf32, #tpu.memory_space<smem>>
    %237 = vector.broadcast %236 : f32 to vector<2x1x16x16xf32>
    %238 = arith.mulf %237, %227 : vector<2x1x16x16xf32>
    %239 = arith.addf %226, %238 : vector<2x1x16x16xf32>
    %c0_75 = arith.constant 0 : index
    %c2_76 = arith.constant 2 : index
    %c0_77 = arith.constant 0 : index
    %c0_78 = arith.constant 0 : index
    %240 = vector.load %arg0[%c0_75, %c2_76, %c0_77, %c0_78] : memref<2x4x18x18xf32, #tpu.memory_space<vmem>>, vector<2x1x16x16xf32>
    %c18 = arith.constant 18 : index
    %241 = memref.load %arg1[%c18] : memref<108xf32, #tpu.memory_space<smem>>
    %242 = vector.broadcast %241 : f32 to vector<2x1x16x16xf32>
    %243 = arith.mulf %242, %240 : vector<2x1x16x16xf32>
    %244 = arith.addf %231, %243 : vector<2x1x16x16xf32>
    %c54 = arith.constant 54 : index
    %245 = memref.load %arg1[%c54] : memref<108xf32, #tpu.memory_space<smem>>
    %246 = vector.broadcast %245 : f32 to vector<2x1x16x16xf32>
    %247 = arith.mulf %246, %240 : vector<2x1x16x16xf32>
    %248 = arith.addf %235, %247 : vector<2x1x16x16xf32>
    %c90 = arith.constant 90 : index
    %249 = memref.load %arg1[%c90] : memref<108xf32, #tpu.memory_space<smem>>
    %250 = vector.broadcast %249 : f32 to vector<2x1x16x16xf32>
    %251 = arith.mulf %250, %240 : vector<2x1x16x16xf32>
    %252 = arith.addf %239, %251 : vector<2x1x16x16xf32>
    %c0_79 = arith.constant 0 : index
    %c2_80 = arith.constant 2 : index
    %c0_81 = arith.constant 0 : index
    %c1_82 = arith.constant 1 : index
    %253 = vector.load %arg0[%c0_79, %c2_80, %c0_81, %c1_82] : memref<2x4x18x18xf32, #tpu.memory_space<vmem>>, vector<2x1x16x16xf32>
    %c19 = arith.constant 19 : index
    %254 = memref.load %arg1[%c19] : memref<108xf32, #tpu.memory_space<smem>>
    %255 = vector.broadcast %254 : f32 to vector<2x1x16x16xf32>
    %256 = arith.mulf %255, %253 : vector<2x1x16x16xf32>
    %257 = arith.addf %244, %256 : vector<2x1x16x16xf32>
    %c55 = arith.constant 55 : index
    %258 = memref.load %arg1[%c55] : memref<108xf32, #tpu.memory_space<smem>>
    %259 = vector.broadcast %258 : f32 to vector<2x1x16x16xf32>
    %260 = arith.mulf %259, %253 : vector<2x1x16x16xf32>
    %261 = arith.addf %248, %260 : vector<2x1x16x16xf32>
    %c91 = arith.constant 91 : index
    %262 = memref.load %arg1[%c91] : memref<108xf32, #tpu.memory_space<smem>>
    %263 = vector.broadcast %262 : f32 to vector<2x1x16x16xf32>
    %264 = arith.mulf %263, %253 : vector<2x1x16x16xf32>
    %265 = arith.addf %252, %264 : vector<2x1x16x16xf32>
    %c0_83 = arith.constant 0 : index
    %c2_84 = arith.constant 2 : index
    %c0_85 = arith.constant 0 : index
    %c2_86 = arith.constant 2 : index
    %266 = vector.load %arg0[%c0_83, %c2_84, %c0_85, %c2_86] : memref<2x4x18x18xf32, #tpu.memory_space<vmem>>, vector<2x1x16x16xf32>
    %c20 = arith.constant 20 : index
    %267 = memref.load %arg1[%c20] : memref<108xf32, #tpu.memory_space<smem>>
    %268 = vector.broadcast %267 : f32 to vector<2x1x16x16xf32>
    %269 = arith.mulf %268, %266 : vector<2x1x16x16xf32>
    %270 = arith.addf %257, %269 : vector<2x1x16x16xf32>
    %c56 = arith.constant 56 : index
    %271 = memref.load %arg1[%c56] : memref<108xf32, #tpu.memory_space<smem>>
    %272 = vector.broadcast %271 : f32 to vector<2x1x16x16xf32>
    %273 = arith.mulf %272, %266 : vector<2x1x16x16xf32>
    %274 = arith.addf %261, %273 : vector<2x1x16x16xf32>
    %c92 = arith.constant 92 : index
    %275 = memref.load %arg1[%c92] : memref<108xf32, #tpu.memory_space<smem>>
    %276 = vector.broadcast %275 : f32 to vector<2x1x16x16xf32>
    %277 = arith.mulf %276, %266 : vector<2x1x16x16xf32>
    %278 = arith.addf %265, %277 : vector<2x1x16x16xf32>
    %c0_87 = arith.constant 0 : index
    %c2_88 = arith.constant 2 : index
    %c1_89 = arith.constant 1 : index
    %c0_90 = arith.constant 0 : index
    %279 = vector.load %arg0[%c0_87, %c2_88, %c1_89, %c0_90] : memref<2x4x18x18xf32, #tpu.memory_space<vmem>>, vector<2x1x16x16xf32>
    %c21 = arith.constant 21 : index
    %280 = memref.load %arg1[%c21] : memref<108xf32, #tpu.memory_space<smem>>
    %281 = vector.broadcast %280 : f32 to vector<2x1x16x16xf32>
    %282 = arith.mulf %281, %279 : vector<2x1x16x16xf32>
    %283 = arith.addf %270, %282 : vector<2x1x16x16xf32>
    %c57 = arith.constant 57 : index
    %284 = memref.load %arg1[%c57] : memref<108xf32, #tpu.memory_space<smem>>
    %285 = vector.broadcast %284 : f32 to vector<2x1x16x16xf32>
    %286 = arith.mulf %285, %279 : vector<2x1x16x16xf32>
    %287 = arith.addf %274, %286 : vector<2x1x16x16xf32>
    %c93 = arith.constant 93 : index
    %288 = memref.load %arg1[%c93] : memref<108xf32, #tpu.memory_space<smem>>
    %289 = vector.broadcast %288 : f32 to vector<2x1x16x16xf32>
    %290 = arith.mulf %289, %279 : vector<2x1x16x16xf32>
    %291 = arith.addf %278, %290 : vector<2x1x16x16xf32>
    %c0_91 = arith.constant 0 : index
    %c2_92 = arith.constant 2 : index
    %c1_93 = arith.constant 1 : index
    %c1_94 = arith.constant 1 : index
    %292 = vector.load %arg0[%c0_91, %c2_92, %c1_93, %c1_94] : memref<2x4x18x18xf32, #tpu.memory_space<vmem>>, vector<2x1x16x16xf32>
    %c22 = arith.constant 22 : index
    %293 = memref.load %arg1[%c22] : memref<108xf32, #tpu.memory_space<smem>>
    %294 = vector.broadcast %293 : f32 to vector<2x1x16x16xf32>
    %295 = arith.mulf %294, %292 : vector<2x1x16x16xf32>
    %296 = arith.addf %283, %295 : vector<2x1x16x16xf32>
    %c58 = arith.constant 58 : index
    %297 = memref.load %arg1[%c58] : memref<108xf32, #tpu.memory_space<smem>>
    %298 = vector.broadcast %297 : f32 to vector<2x1x16x16xf32>
    %299 = arith.mulf %298, %292 : vector<2x1x16x16xf32>
    %300 = arith.addf %287, %299 : vector<2x1x16x16xf32>
    %c94 = arith.constant 94 : index
    %301 = memref.load %arg1[%c94] : memref<108xf32, #tpu.memory_space<smem>>
    %302 = vector.broadcast %301 : f32 to vector<2x1x16x16xf32>
    %303 = arith.mulf %302, %292 : vector<2x1x16x16xf32>
    %304 = arith.addf %291, %303 : vector<2x1x16x16xf32>
    %c0_95 = arith.constant 0 : index
    %c2_96 = arith.constant 2 : index
    %c1_97 = arith.constant 1 : index
    %c2_98 = arith.constant 2 : index
    %305 = vector.load %arg0[%c0_95, %c2_96, %c1_97, %c2_98] : memref<2x4x18x18xf32, #tpu.memory_space<vmem>>, vector<2x1x16x16xf32>
    %c23 = arith.constant 23 : index
    %306 = memref.load %arg1[%c23] : memref<108xf32, #tpu.memory_space<smem>>
    %307 = vector.broadcast %306 : f32 to vector<2x1x16x16xf32>
    %308 = arith.mulf %307, %305 : vector<2x1x16x16xf32>
    %309 = arith.addf %296, %308 : vector<2x1x16x16xf32>
    %c59 = arith.constant 59 : index
    %310 = memref.load %arg1[%c59] : memref<108xf32, #tpu.memory_space<smem>>
    %311 = vector.broadcast %310 : f32 to vector<2x1x16x16xf32>
    %312 = arith.mulf %311, %305 : vector<2x1x16x16xf32>
    %313 = arith.addf %300, %312 : vector<2x1x16x16xf32>
    %c95 = arith.constant 95 : index
    %314 = memref.load %arg1[%c95] : memref<108xf32, #tpu.memory_space<smem>>
    %315 = vector.broadcast %314 : f32 to vector<2x1x16x16xf32>
    %316 = arith.mulf %315, %305 : vector<2x1x16x16xf32>
    %317 = arith.addf %304, %316 : vector<2x1x16x16xf32>
    %c0_99 = arith.constant 0 : index
    %c2_100 = arith.constant 2 : index
    %c2_101 = arith.constant 2 : index
    %c0_102 = arith.constant 0 : index
    %318 = vector.load %arg0[%c0_99, %c2_100, %c2_101, %c0_102] : memref<2x4x18x18xf32, #tpu.memory_space<vmem>>, vector<2x1x16x16xf32>
    %c24 = arith.constant 24 : index
    %319 = memref.load %arg1[%c24] : memref<108xf32, #tpu.memory_space<smem>>
    %320 = vector.broadcast %319 : f32 to vector<2x1x16x16xf32>
    %321 = arith.mulf %320, %318 : vector<2x1x16x16xf32>
    %322 = arith.addf %309, %321 : vector<2x1x16x16xf32>
    %c60 = arith.constant 60 : index
    %323 = memref.load %arg1[%c60] : memref<108xf32, #tpu.memory_space<smem>>
    %324 = vector.broadcast %323 : f32 to vector<2x1x16x16xf32>
    %325 = arith.mulf %324, %318 : vector<2x1x16x16xf32>
    %326 = arith.addf %313, %325 : vector<2x1x16x16xf32>
    %c96 = arith.constant 96 : index
    %327 = memref.load %arg1[%c96] : memref<108xf32, #tpu.memory_space<smem>>
    %328 = vector.broadcast %327 : f32 to vector<2x1x16x16xf32>
    %329 = arith.mulf %328, %318 : vector<2x1x16x16xf32>
    %330 = arith.addf %317, %329 : vector<2x1x16x16xf32>
    %c0_103 = arith.constant 0 : index
    %c2_104 = arith.constant 2 : index
    %c2_105 = arith.constant 2 : index
    %c1_106 = arith.constant 1 : index
    %331 = vector.load %arg0[%c0_103, %c2_104, %c2_105, %c1_106] : memref<2x4x18x18xf32, #tpu.memory_space<vmem>>, vector<2x1x16x16xf32>
    %c25 = arith.constant 25 : index
    %332 = memref.load %arg1[%c25] : memref<108xf32, #tpu.memory_space<smem>>
    %333 = vector.broadcast %332 : f32 to vector<2x1x16x16xf32>
    %334 = arith.mulf %333, %331 : vector<2x1x16x16xf32>
    %335 = arith.addf %322, %334 : vector<2x1x16x16xf32>
    %c61 = arith.constant 61 : index
    %336 = memref.load %arg1[%c61] : memref<108xf32, #tpu.memory_space<smem>>
    %337 = vector.broadcast %336 : f32 to vector<2x1x16x16xf32>
    %338 = arith.mulf %337, %331 : vector<2x1x16x16xf32>
    %339 = arith.addf %326, %338 : vector<2x1x16x16xf32>
    %c97 = arith.constant 97 : index
    %340 = memref.load %arg1[%c97] : memref<108xf32, #tpu.memory_space<smem>>
    %341 = vector.broadcast %340 : f32 to vector<2x1x16x16xf32>
    %342 = arith.mulf %341, %331 : vector<2x1x16x16xf32>
    %343 = arith.addf %330, %342 : vector<2x1x16x16xf32>
    %c0_107 = arith.constant 0 : index
    %c2_108 = arith.constant 2 : index
    %c2_109 = arith.constant 2 : index
    %c2_110 = arith.constant 2 : index
    %344 = vector.load %arg0[%c0_107, %c2_108, %c2_109, %c2_110] : memref<2x4x18x18xf32, #tpu.memory_space<vmem>>, vector<2x1x16x16xf32>
    %c26 = arith.constant 26 : index
    %345 = memref.load %arg1[%c26] : memref<108xf32, #tpu.memory_space<smem>>
    %346 = vector.broadcast %345 : f32 to vector<2x1x16x16xf32>
    %347 = arith.mulf %346, %344 : vector<2x1x16x16xf32>
    %348 = arith.addf %335, %347 : vector<2x1x16x16xf32>
    %c62 = arith.constant 62 : index
    %349 = memref.load %arg1[%c62] : memref<108xf32, #tpu.memory_space<smem>>
    %350 = vector.broadcast %349 : f32 to vector<2x1x16x16xf32>
    %351 = arith.mulf %350, %344 : vector<2x1x16x16xf32>
    %352 = arith.addf %339, %351 : vector<2x1x16x16xf32>
    %c98 = arith.constant 98 : index
    %353 = memref.load %arg1[%c98] : memref<108xf32, #tpu.memory_space<smem>>
    %354 = vector.broadcast %353 : f32 to vector<2x1x16x16xf32>
    %355 = arith.mulf %354, %344 : vector<2x1x16x16xf32>
    %356 = arith.addf %343, %355 : vector<2x1x16x16xf32>
    %c0_111 = arith.constant 0 : index
    %c3_112 = arith.constant 3 : index
    %c0_113 = arith.constant 0 : index
    %c0_114 = arith.constant 0 : index
    %357 = vector.load %arg0[%c0_111, %c3_112, %c0_113, %c0_114] : memref<2x4x18x18xf32, #tpu.memory_space<vmem>>, vector<2x1x16x16xf32>
    %c27 = arith.constant 27 : index
    %358 = memref.load %arg1[%c27] : memref<108xf32, #tpu.memory_space<smem>>
    %359 = vector.broadcast %358 : f32 to vector<2x1x16x16xf32>
    %360 = arith.mulf %359, %357 : vector<2x1x16x16xf32>
    %361 = arith.addf %348, %360 : vector<2x1x16x16xf32>
    %c63 = arith.constant 63 : index
    %362 = memref.load %arg1[%c63] : memref<108xf32, #tpu.memory_space<smem>>
    %363 = vector.broadcast %362 : f32 to vector<2x1x16x16xf32>
    %364 = arith.mulf %363, %357 : vector<2x1x16x16xf32>
    %365 = arith.addf %352, %364 : vector<2x1x16x16xf32>
    %c99 = arith.constant 99 : index
    %366 = memref.load %arg1[%c99] : memref<108xf32, #tpu.memory_space<smem>>
    %367 = vector.broadcast %366 : f32 to vector<2x1x16x16xf32>
    %368 = arith.mulf %367, %357 : vector<2x1x16x16xf32>
    %369 = arith.addf %356, %368 : vector<2x1x16x16xf32>
    %c0_115 = arith.constant 0 : index
    %c3_116 = arith.constant 3 : index
    %c0_117 = arith.constant 0 : index
    %c1_118 = arith.constant 1 : index
    %370 = vector.load %arg0[%c0_115, %c3_116, %c0_117, %c1_118] : memref<2x4x18x18xf32, #tpu.memory_space<vmem>>, vector<2x1x16x16xf32>
    %c28 = arith.constant 28 : index
    %371 = memref.load %arg1[%c28] : memref<108xf32, #tpu.memory_space<smem>>
    %372 = vector.broadcast %371 : f32 to vector<2x1x16x16xf32>
    %373 = arith.mulf %372, %370 : vector<2x1x16x16xf32>
    %374 = arith.addf %361, %373 : vector<2x1x16x16xf32>
    %c64 = arith.constant 64 : index
    %375 = memref.load %arg1[%c64] : memref<108xf32, #tpu.memory_space<smem>>
    %376 = vector.broadcast %375 : f32 to vector<2x1x16x16xf32>
    %377 = arith.mulf %376, %370 : vector<2x1x16x16xf32>
    %378 = arith.addf %365, %377 : vector<2x1x16x16xf32>
    %c100 = arith.constant 100 : index
    %379 = memref.load %arg1[%c100] : memref<108xf32, #tpu.memory_space<smem>>
    %380 = vector.broadcast %379 : f32 to vector<2x1x16x16xf32>
    %381 = arith.mulf %380, %370 : vector<2x1x16x16xf32>
    %382 = arith.addf %369, %381 : vector<2x1x16x16xf32>
    %c0_119 = arith.constant 0 : index
    %c3_120 = arith.constant 3 : index
    %c0_121 = arith.constant 0 : index
    %c2_122 = arith.constant 2 : index
    %383 = vector.load %arg0[%c0_119, %c3_120, %c0_121, %c2_122] : memref<2x4x18x18xf32, #tpu.memory_space<vmem>>, vector<2x1x16x16xf32>
    %c29 = arith.constant 29 : index
    %384 = memref.load %arg1[%c29] : memref<108xf32, #tpu.memory_space<smem>>
    %385 = vector.broadcast %384 : f32 to vector<2x1x16x16xf32>
    %386 = arith.mulf %385, %383 : vector<2x1x16x16xf32>
    %387 = arith.addf %374, %386 : vector<2x1x16x16xf32>
    %c65 = arith.constant 65 : index
    %388 = memref.load %arg1[%c65] : memref<108xf32, #tpu.memory_space<smem>>
    %389 = vector.broadcast %388 : f32 to vector<2x1x16x16xf32>
    %390 = arith.mulf %389, %383 : vector<2x1x16x16xf32>
    %391 = arith.addf %378, %390 : vector<2x1x16x16xf32>
    %c101 = arith.constant 101 : index
    %392 = memref.load %arg1[%c101] : memref<108xf32, #tpu.memory_space<smem>>
    %393 = vector.broadcast %392 : f32 to vector<2x1x16x16xf32>
    %394 = arith.mulf %393, %383 : vector<2x1x16x16xf32>
    %395 = arith.addf %382, %394 : vector<2x1x16x16xf32>
    %c0_123 = arith.constant 0 : index
    %c3_124 = arith.constant 3 : index
    %c1_125 = arith.constant 1 : index
    %c0_126 = arith.constant 0 : index
    %396 = vector.load %arg0[%c0_123, %c3_124, %c1_125, %c0_126] : memref<2x4x18x18xf32, #tpu.memory_space<vmem>>, vector<2x1x16x16xf32>
    %c30 = arith.constant 30 : index
    %397 = memref.load %arg1[%c30] : memref<108xf32, #tpu.memory_space<smem>>
    %398 = vector.broadcast %397 : f32 to vector<2x1x16x16xf32>
    %399 = arith.mulf %398, %396 : vector<2x1x16x16xf32>
    %400 = arith.addf %387, %399 : vector<2x1x16x16xf32>
    %c66 = arith.constant 66 : index
    %401 = memref.load %arg1[%c66] : memref<108xf32, #tpu.memory_space<smem>>
    %402 = vector.broadcast %401 : f32 to vector<2x1x16x16xf32>
    %403 = arith.mulf %402, %396 : vector<2x1x16x16xf32>
    %404 = arith.addf %391, %403 : vector<2x1x16x16xf32>
    %c102 = arith.constant 102 : index
    %405 = memref.load %arg1[%c102] : memref<108xf32, #tpu.memory_space<smem>>
    %406 = vector.broadcast %405 : f32 to vector<2x1x16x16xf32>
    %407 = arith.mulf %406, %396 : vector<2x1x16x16xf32>
    %408 = arith.addf %395, %407 : vector<2x1x16x16xf32>
    %c0_127 = arith.constant 0 : index
    %c3_128 = arith.constant 3 : index
    %c1_129 = arith.constant 1 : index
    %c1_130 = arith.constant 1 : index
    %409 = vector.load %arg0[%c0_127, %c3_128, %c1_129, %c1_130] : memref<2x4x18x18xf32, #tpu.memory_space<vmem>>, vector<2x1x16x16xf32>
    %c31 = arith.constant 31 : index
    %410 = memref.load %arg1[%c31] : memref<108xf32, #tpu.memory_space<smem>>
    %411 = vector.broadcast %410 : f32 to vector<2x1x16x16xf32>
    %412 = arith.mulf %411, %409 : vector<2x1x16x16xf32>
    %413 = arith.addf %400, %412 : vector<2x1x16x16xf32>
    %c67 = arith.constant 67 : index
    %414 = memref.load %arg1[%c67] : memref<108xf32, #tpu.memory_space<smem>>
    %415 = vector.broadcast %414 : f32 to vector<2x1x16x16xf32>
    %416 = arith.mulf %415, %409 : vector<2x1x16x16xf32>
    %417 = arith.addf %404, %416 : vector<2x1x16x16xf32>
    %c103 = arith.constant 103 : index
    %418 = memref.load %arg1[%c103] : memref<108xf32, #tpu.memory_space<smem>>
    %419 = vector.broadcast %418 : f32 to vector<2x1x16x16xf32>
    %420 = arith.mulf %419, %409 : vector<2x1x16x16xf32>
    %421 = arith.addf %408, %420 : vector<2x1x16x16xf32>
    %c0_131 = arith.constant 0 : index
    %c3_132 = arith.constant 3 : index
    %c1_133 = arith.constant 1 : index
    %c2_134 = arith.constant 2 : index
    %422 = vector.load %arg0[%c0_131, %c3_132, %c1_133, %c2_134] : memref<2x4x18x18xf32, #tpu.memory_space<vmem>>, vector<2x1x16x16xf32>
    %c32 = arith.constant 32 : index
    %423 = memref.load %arg1[%c32] : memref<108xf32, #tpu.memory_space<smem>>
    %424 = vector.broadcast %423 : f32 to vector<2x1x16x16xf32>
    %425 = arith.mulf %424, %422 : vector<2x1x16x16xf32>
    %426 = arith.addf %413, %425 : vector<2x1x16x16xf32>
    %c68 = arith.constant 68 : index
    %427 = memref.load %arg1[%c68] : memref<108xf32, #tpu.memory_space<smem>>
    %428 = vector.broadcast %427 : f32 to vector<2x1x16x16xf32>
    %429 = arith.mulf %428, %422 : vector<2x1x16x16xf32>
    %430 = arith.addf %417, %429 : vector<2x1x16x16xf32>
    %c104 = arith.constant 104 : index
    %431 = memref.load %arg1[%c104] : memref<108xf32, #tpu.memory_space<smem>>
    %432 = vector.broadcast %431 : f32 to vector<2x1x16x16xf32>
    %433 = arith.mulf %432, %422 : vector<2x1x16x16xf32>
    %434 = arith.addf %421, %433 : vector<2x1x16x16xf32>
    %c0_135 = arith.constant 0 : index
    %c3_136 = arith.constant 3 : index
    %c2_137 = arith.constant 2 : index
    %c0_138 = arith.constant 0 : index
    %435 = vector.load %arg0[%c0_135, %c3_136, %c2_137, %c0_138] : memref<2x4x18x18xf32, #tpu.memory_space<vmem>>, vector<2x1x16x16xf32>
    %c33 = arith.constant 33 : index
    %436 = memref.load %arg1[%c33] : memref<108xf32, #tpu.memory_space<smem>>
    %437 = vector.broadcast %436 : f32 to vector<2x1x16x16xf32>
    %438 = arith.mulf %437, %435 : vector<2x1x16x16xf32>
    %439 = arith.addf %426, %438 : vector<2x1x16x16xf32>
    %c69 = arith.constant 69 : index
    %440 = memref.load %arg1[%c69] : memref<108xf32, #tpu.memory_space<smem>>
    %441 = vector.broadcast %440 : f32 to vector<2x1x16x16xf32>
    %442 = arith.mulf %441, %435 : vector<2x1x16x16xf32>
    %443 = arith.addf %430, %442 : vector<2x1x16x16xf32>
    %c105 = arith.constant 105 : index
    %444 = memref.load %arg1[%c105] : memref<108xf32, #tpu.memory_space<smem>>
    %445 = vector.broadcast %444 : f32 to vector<2x1x16x16xf32>
    %446 = arith.mulf %445, %435 : vector<2x1x16x16xf32>
    %447 = arith.addf %434, %446 : vector<2x1x16x16xf32>
    %c0_139 = arith.constant 0 : index
    %c3_140 = arith.constant 3 : index
    %c2_141 = arith.constant 2 : index
    %c1_142 = arith.constant 1 : index
    %448 = vector.load %arg0[%c0_139, %c3_140, %c2_141, %c1_142] : memref<2x4x18x18xf32, #tpu.memory_space<vmem>>, vector<2x1x16x16xf32>
    %c34 = arith.constant 34 : index
    %449 = memref.load %arg1[%c34] : memref<108xf32, #tpu.memory_space<smem>>
    %450 = vector.broadcast %449 : f32 to vector<2x1x16x16xf32>
    %451 = arith.mulf %450, %448 : vector<2x1x16x16xf32>
    %452 = arith.addf %439, %451 : vector<2x1x16x16xf32>
    %c70 = arith.constant 70 : index
    %453 = memref.load %arg1[%c70] : memref<108xf32, #tpu.memory_space<smem>>
    %454 = vector.broadcast %453 : f32 to vector<2x1x16x16xf32>
    %455 = arith.mulf %454, %448 : vector<2x1x16x16xf32>
    %456 = arith.addf %443, %455 : vector<2x1x16x16xf32>
    %c106 = arith.constant 106 : index
    %457 = memref.load %arg1[%c106] : memref<108xf32, #tpu.memory_space<smem>>
    %458 = vector.broadcast %457 : f32 to vector<2x1x16x16xf32>
    %459 = arith.mulf %458, %448 : vector<2x1x16x16xf32>
    %460 = arith.addf %447, %459 : vector<2x1x16x16xf32>
    %c0_143 = arith.constant 0 : index
    %c3_144 = arith.constant 3 : index
    %c2_145 = arith.constant 2 : index
    %c2_146 = arith.constant 2 : index
    %461 = vector.load %arg0[%c0_143, %c3_144, %c2_145, %c2_146] : memref<2x4x18x18xf32, #tpu.memory_space<vmem>>, vector<2x1x16x16xf32>
    %c35 = arith.constant 35 : index
    %462 = memref.load %arg1[%c35] : memref<108xf32, #tpu.memory_space<smem>>
    %463 = vector.broadcast %462 : f32 to vector<2x1x16x16xf32>
    %464 = arith.mulf %463, %461 : vector<2x1x16x16xf32>
    %465 = arith.addf %452, %464 : vector<2x1x16x16xf32>
    %c71 = arith.constant 71 : index
    %466 = memref.load %arg1[%c71] : memref<108xf32, #tpu.memory_space<smem>>
    %467 = vector.broadcast %466 : f32 to vector<2x1x16x16xf32>
    %468 = arith.mulf %467, %461 : vector<2x1x16x16xf32>
    %469 = arith.addf %456, %468 : vector<2x1x16x16xf32>
    %c107 = arith.constant 107 : index
    %470 = memref.load %arg1[%c107] : memref<108xf32, #tpu.memory_space<smem>>
    %471 = vector.broadcast %470 : f32 to vector<2x1x16x16xf32>
    %472 = arith.mulf %471, %461 : vector<2x1x16x16xf32>
    %473 = arith.addf %460, %472 : vector<2x1x16x16xf32>
    %c0_147 = arith.constant 0 : index
    %c0_148 = arith.constant 0 : index
    %c0_149 = arith.constant 0 : index
    %c0_150 = arith.constant 0 : index
    %474 = vector.load %arg3[%c0_147, %c0_148, %c0_149, %c0_150] : memref<2x3x16x16xf32, #tpu.memory_space<vmem>>, vector<2x1x16x16xf32>
    tpu.vector_store %arg3[%c0_147, %c0_148, %c0_149, %c0_150], %465 {strides = array<i32>} : memref<2x3x16x16xf32, #tpu.memory_space<vmem>>, vector<2x1x16x16xf32>,
    %c0_151 = arith.constant 0 : index
    %c1_152 = arith.constant 1 : index
    %c0_153 = arith.constant 0 : index
    %c0_154 = arith.constant 0 : index
    %475 = vector.load %arg3[%c0_151, %c1_152, %c0_153, %c0_154] : memref<2x3x16x16xf32, #tpu.memory_space<vmem>>, vector<2x1x16x16xf32>
    tpu.vector_store %arg3[%c0_151, %c1_152, %c0_153, %c0_154], %469 {strides = array<i32>} : memref<2x3x16x16xf32, #tpu.memory_space<vmem>>, vector<2x1x16x16xf32>,
    %c0_155 = arith.constant 0 : index
    %c2_156 = arith.constant 2 : index
    %c0_157 = arith.constant 0 : index
    %c0_158 = arith.constant 0 : index
    %476 = vector.load %arg3[%c0_155, %c2_156, %c0_157, %c0_158] : memref<2x3x16x16xf32, #tpu.memory_space<vmem>>, vector<2x1x16x16xf32>
    tpu.vector_store %arg3[%c0_155, %c2_156, %c0_157, %c0_158], %473 {strides = array<i32>} : memref<2x3x16x16xf32, #tpu.memory_space<vmem>>, vector<2x1x16x16xf32>,
    return
  }
}

</mosaic_0001>

<llo_original>
// kernel: tpu_custom_call.1
$region0: #{tpu_custom_call.1}
  #allocation0 [shape = 'u32[]', space=smem, size = 0x4, offset = 0x4, fixed_abs, tag = 'smem constant byte address 0x4 - core index']
  #allocation1 [shape = 'u32[72,128]{1,0:T(1,128)}', space=vmem, size = 0x9000, scoped, tag = 'internal scratch']
  %s0 = inlined_call_operand.vmem [shape: f32[2,4,18,18], index: 0, kind: input, shape index: {}]
  %s1 = inlined_call_operand.vmem [shape: f32[108], index: 1, kind: input, shape index: {}]
  %s2 = inlined_call_operand.vmem [shape: f32[3], index: 2, kind: input, shape index: {}]
  %s3 = inlined_call_operand.hbm [shape: f32[2,3,16,16], index: 3, kind: output, shape index: {}]
  %s4 = sld [smem:[#allocation0]]
  $region30: #{tpu_custom_call.1} parent=0
    _
  %s6 = ssub.s32 1, %s4
  %s7 = scalar_select 0, %s6, %s4
  $region1: #{tpu_custom_call.1} parent=0
    #allocation2 [shape = 'u8[512]{0}', space=smem, size = 0x200, scoped, tag = 'input window, operand 1, single buffered']
    #allocation3 [shape = 's32[1]{0}', space=sflag, size = 0x4, scoped, tag = 'scoped memory for tpu_custom_call.1']
    #allocation4 [shape = 's32[1]{0}', space=sflag, size = 0x4, scoped, tag = 'scoped memory for tpu_custom_call.1']
    #allocation5 [shape = 'u8[512]{0}', space=smem, size = 0x200, scoped, tag = 'input window, operand 2, single buffered']
    #allocation6 [shape = 's32[1]{0}', space=sflag, size = 0x4, scoped, tag = 'scoped memory for tpu_custom_call.1']
    #allocation7 [shape = 'u8[49152]{0}', space=vmem, size = 0xc000, scoped, tag = 'output window, operand 0, single buffered']
    %8 = vsyncpa [#allocation4], 0
    %9 = vsyncpa [#allocation6], 0
    %10 = vsyncpa [#allocation3], 0
    // Predicated region
    $region2: #{tpu_custom_call.1} parent=1 // pred_check
      _
    $region3: #{tpu_custom_call.1} parent=1 // pred_check_branch
      %12 = sbr.rel (0) target = $region5
    $region4: #{tpu_custom_call.1} parent=1 // pred_region
      _
    $region5: #{tpu_custom_call.1} parent=1 // pred_fallthru
      _
    // Predicated region
    $region6: #{tpu_custom_call.1} parent=1 // pred_check
      _
    $region7: #{tpu_custom_call.1} parent=1 // pred_check_branch
      %14 = sbr.rel (0) target = $region9
    $region8: #{tpu_custom_call.1} parent=1 // pred_region
      %16 = vsyncadd [#allocation4], 0
      %s18 = sshll.u32 %s1, 4
      %s19 = int_to_ptr.vmem [resolvable:$true] %s18
      %21 = dma.vmem_to_smem %s19, 16, [#allocation2], [#allocation4]
    $region9: #{tpu_custom_call.1} parent=1 // pred_fallthru
      _
    // Predicated region
    $region10: #{tpu_custom_call.1} parent=1 // pred_check
      _
    $region11: #{tpu_custom_call.1} parent=1 // pred_check_branch
      %23 = sbr.rel (0) target = $region13
    $region12: #{tpu_custom_call.1} parent=1 // pred_region
      %25 = vsyncadd [#allocation6], 0
      %s27 = sshll.u32 %s2, 4
      %s28 = int_to_ptr.vmem [resolvable:$true] %s27
      %30 = dma.vmem_to_smem %s28, 16, [#allocation5], [#allocation6]
    $region13: #{tpu_custom_call.1} parent=1 // pred_fallthru
      _
    // Predicated region
    $region14: #{tpu_custom_call.1} parent=1 // pred_check
      _
    $region15: #{tpu_custom_call.1} parent=1 // pred_check_branch
      %32 = sbr.rel (0) target = $region17
    $region16: #{tpu_custom_call.1} parent=1 // pred_region
      %34 = dma.done [#allocation4], 16
    $region17: #{tpu_custom_call.1} parent=1 // pred_fallthru
      _
    // Predicated region
    $region18: #{tpu_custom_call.1} parent=1 // pred_check
      _
    $region19: #{tpu_custom_call.1} parent=1 // pred_check_branch
      %36 = sbr.rel (0) target = $region21
    $region20: #{tpu_custom_call.1} parent=1 // pred_region
      %38 = dma.done [#allocation6], 16
    $region21: #{tpu_custom_call.1} parent=1 // pred_fallthru
      _
    %39 = sfence
    %s40 = sld [smem:[#allocation5]]
    %v41 = vstv %s40
    %s42 = sld [smem:[#allocation5 + $0x1]]
    %v43 = vstv %s42
    %s44 = sld [smem:[#allocation5 + $0x2]]
    %v45 = vstv %s44
    %v46 = vld [vmem:[%s0] sm:$0xff]
    %v47 = vld [vmem:[%s0 + $0x8] sm:$0xff]
    %v48 = vld [vmem:[%s0 + $0x60] sm:$0xff]
    %v49 = vld [vmem:[%s0 + $0x68] sm:$0xff]
    %s50 = sld [smem:[#allocation2]]
    %v51 = vstv %s50
    %v52 = vmul.f32 %v51, %v46
    %v53 = vmul.f32 %v51, %v47
    %v54 = vmul.f32 %v51, %v48
    %v55 = vmul.f32 %v51, %v49
    %v56 = vadd.f32 %v41, %v52
    %v57 = vadd.f32 %v41, %v53
    %v58 = vadd.f32 %v41, %v54
    %v59 = vadd.f32 %v41, %v55
    %s60 = sld [smem:[#allocation2 + $0x24]]
    %v61 = vstv %s60
    %v62 = vmul.f32 %v61, %v46
    %v63 = vmul.f32 %v61, %v47
    %v64 = vmul.f32 %v61, %v48
    %v65 = vmul.f32 %v61, %v49
    %v66 = vadd.f32 %v43, %v62
    %v67 = vadd.f32 %v43, %v63
    %v68 = vadd.f32 %v43, %v64
    %v69 = vadd.f32 %v43, %v65
    %s70 = sld [smem:[#allocation2 + $0x48]]
    %v71 = vstv %s70
    %v72 = vmul.f32 %v71, %v46
    %v73 = vmul.f32 %v71, %v47
    %v74 = vmul.f32 %v71, %v48
    %v75 = vmul.f32 %v71, %v49
    %v76 = vadd.f32 %v45, %v72
    %v77 = vadd.f32 %v45, %v73
    %v78 = vadd.f32 %v45, %v74
    %v79 = vadd.f32 %v45, %v75
    %s80 = sld [smem:[#allocation2 + $0x1]]
    %v81 = vstv %s80
    %v82 = vmul.f32 %v81, %v46
    %v83 = vmul.f32 %v81, %v47
    %v84 = vmul.f32 %v81, %v48
    %v85 = vmul.f32 %v81, %v49
    %90 = vrot.lane.b32.xlu0 %v82, 127
    %v91 = vpop.permute.xlu0 %90
    %92 = vrot.lane.b32.xlu0 %v83, 127
    %v93 = vpop.permute.xlu0 %92
    %94 = vrot.lane.b32.xlu0 %v84, 127
    %v95 = vpop.permute.xlu0 %94
    %96 = vrot.lane.b32.xlu0 %v85, 127
    %v97 = vpop.permute.xlu0 %96
    %v102 = vadd.f32 %v56, %v91
    %v103 = vadd.f32 %v57, %v93
    %v104 = vadd.f32 %v58, %v95
    %v105 = vadd.f32 %v59, %v97
    %s106 = sld [smem:[#allocation2 + $0x25]]
    %v107 = vstv %s106
    %v108 = vmul.f32 %v107, %v46
    %v109 = vmul.f32 %v107, %v47
    %v110 = vmul.f32 %v107, %v48
    %v111 = vmul.f32 %v107, %v49
    %116 = vrot.lane.b32.xlu0 %v108, 127
    %v117 = vpop.permute.xlu0 %116
    %118 = vrot.lane.b32.xlu0 %v109, 127
    %v119 = vpop.permute.xlu0 %118
    %120 = vrot.lane.b32.xlu0 %v110, 127
    %v121 = vpop.permute.xlu0 %120
    %122 = vrot.lane.b32.xlu0 %v111, 127
    %v123 = vpop.permute.xlu0 %122
    %v128 = vadd.f32 %v66, %v117
    %v129 = vadd.f32 %v67, %v119
    %v130 = vadd.f32 %v68, %v121
    %v131 = vadd.f32 %v69, %v123
    %s132 = sld [smem:[#allocation2 + $0x49]]
    %v133 = vstv %s132
    %v134 = vmul.f32 %v133, %v46
    %v135 = vmul.f32 %v133, %v47
    %v136 = vmul.f32 %v133, %v48
    %v137 = vmul.f32 %v133, %v49
    %142 = vrot.lane.b32.xlu0 %v134, 127
    %v143 = vpop.permute.xlu0 %142
    %144 = vrot.lane.b32.xlu0 %v135, 127
    %v145 = vpop.permute.xlu0 %144
    %146 = vrot.lane.b32.xlu0 %v136, 127
    %v147 = vpop.permute.xlu0 %146
    %148 = vrot.lane.b32.xlu0 %v137, 127
    %v149 = vpop.permute.xlu0 %148
    %v154 = vadd.f32 %v76, %v143
    %v155 = vadd.f32 %v77, %v145
    %v156 = vadd.f32 %v78, %v147
    %v157 = vadd.f32 %v79, %v149
    %s158 = sld [smem:[#allocation2 + $0x2]]
    %v159 = vstv %s158
    %v160 = vmul.f32 %v159, %v46
    %v161 = vmul.f32 %v159, %v47
    %v162 = vmul.f32 %v159, %v48
    %v163 = vmul.f32 %v159, %v49
    %168 = vrot.lane.b32.xlu0 %v160, 126
    %v169 = vpop.permute.xlu0 %168
    %170 = vrot.lane.b32.xlu0 %v161, 126
    %v171 = vpop.permute.xlu0 %170
    %172 = vrot.lane.b32.xlu0 %v162, 126
    %v173 = vpop.permute.xlu0 %172
    %174 = vrot.lane.b32.xlu0 %v163, 126
    %v175 = vpop.permute.xlu0 %174
    %v180 = vadd.f32 %v102, %v169
    %v181 = vadd.f32 %v103, %v171
    %v182 = vadd.f32 %v104, %v173
    %v183 = vadd.f32 %v105, %v175
    %s184 = sld [smem:[#allocation2 + $0x26]]
    %v185 = vstv %s184
    %v186 = vmul.f32 %v185, %v46
    %v187 = vmul.f32 %v185, %v47
    %v188 = vmul.f32 %v185, %v48
    %v189 = vmul.f32 %v185, %v49
    %194 = vrot.lane.b32.xlu0 %v186, 126
    %v195 = vpop.permute.xlu0 %194
    %196 = vrot.lane.b32.xlu0 %v187, 126
    %v197 = vpop.permute.xlu0 %196
    %198 = vrot.lane.b32.xlu0 %v188, 126
    %v199 = vpop.permute.xlu0 %198
    %200 = vrot.lane.b32.xlu0 %v189, 126
    %v201 = vpop.permute.xlu0 %200
    %v206 = vadd.f32 %v128, %v195
    %v207 = vadd.f32 %v129, %v197
    %v208 = vadd.f32 %v130, %v199
    %v209 = vadd.f32 %v131, %v201
    %s210 = sld [smem:[#allocation2 + $0x4a]]
    %v211 = vstv %s210
    %v212 = vmul.f32 %v211, %v46
    %v213 = vmul.f32 %v211, %v47
    %v214 = vmul.f32 %v211, %v48
    %v215 = vmul.f32 %v211, %v49
    %220 = vrot.lane.b32.xlu0 %v212, 126
    %v221 = vpop.permute.xlu0 %220
    %222 = vrot.lane.b32.xlu0 %v213, 126
    %v223 = vpop.permute.xlu0 %222
    %224 = vrot.lane.b32.xlu0 %v214, 126
    %v225 = vpop.permute.xlu0 %224
    %226 = vrot.lane.b32.xlu0 %v215, 126
    %v227 = vpop.permute.xlu0 %226
    %v232 = vadd.f32 %v154, %v221
    %v233 = vadd.f32 %v155, %v223
    %v234 = vadd.f32 %v156, %v225
    %v235 = vadd.f32 %v157, %v227
    %v236 = vld [vmem:[%s0 + $0x1] sm:$0xff]
    %v237 = vld [vmem:[%s0 + $0x9] sm:$0xff]
    %v238 = vld [vmem:[%s0 + $0x61] sm:$0xff]
    %v239 = vld [vmem:[%s0 + $0x69] sm:$0xff]
    %s240 = sld [smem:[#allocation2 + $0x3]]
    %v241 = vstv %s240
    %v242 = vmul.f32 %v241, %v236
    %v243 = vmul.f32 %v241, %v237
    %v244 = vmul.f32 %v241, %v238
    %v245 = vmul.f32 %v241, %v239
    %v246 = vadd.f32 %v180, %v242
    %v247 = vadd.f32 %v181, %v243
    %v248 = vadd.f32 %v182, %v244
    %v249 = vadd.f32 %v183, %v245
    %s250 = sld [smem:[#allocation2 + $0x27]]
    %v251 = vstv %s250
    %v252 = vmul.f32 %v251, %v236
    %v253 = vmul.f32 %v251, %v237
    %v254 = vmul.f32 %v251, %v238
    %v255 = vmul.f32 %v251, %v239
    %v256 = vadd.f32 %v206, %v252
    %v257 = vadd.f32 %v207, %v253
    %v258 = vadd.f32 %v208, %v254
    %v259 = vadd.f32 %v209, %v255
    %s260 = sld [smem:[#allocation2 + $0x4b]]
    %v261 = vstv %s260
    %v262 = vmul.f32 %v261, %v236
    %v263 = vmul.f32 %v261, %v237
    %v264 = vmul.f32 %v261, %v238
    %v265 = vmul.f32 %v261, %v239
    %v266 = vadd.f32 %v232, %v262
    %v267 = vadd.f32 %v233, %v263
    %v268 = vadd.f32 %v234, %v264
    %v269 = vadd.f32 %v235, %v265
    %s270 = sld [smem:[#allocation2 + $0x4]]
    %v271 = vstv %s270
    %v272 = vmul.f32 %v271, %v236
    %v273 = vmul.f32 %v271, %v237
    %v274 = vmul.f32 %v271, %v238
    %v275 = vmul.f32 %v271, %v239
    %280 = vrot.lane.b32.xlu0 %v272, 127
    %v281 = vpop.permute.xlu0 %280
    %282 = vrot.lane.b32.xlu0 %v273, 127
    %v283 = vpop.permute.xlu0 %282
    %284 = vrot.lane.b32.xlu0 %v274, 127
    %v285 = vpop.permute.xlu0 %284
    %286 = vrot.lane.b32.xlu0 %v275, 127
    %v287 = vpop.permute.xlu0 %286
    %v292 = vadd.f32 %v246, %v281
    %v293 = vadd.f32 %v247, %v283
    %v294 = vadd.f32 %v248, %v285
    %v295 = vadd.f32 %v249, %v287
    %s296 = sld [smem:[#allocation2 + $0x28]]
    %v297 = vstv %s296
    %v298 = vmul.f32 %v297, %v236
    %v299 = vmul.f32 %v297, %v237
    %v300 = vmul.f32 %v297, %v238
    %v301 = vmul.f32 %v297, %v239
    %306 = vrot.lane.b32.xlu0 %v298, 127
    %v307 = vpop.permute.xlu0 %306
    %308 = vrot.lane.b32.xlu0 %v299, 127
    %v309 = vpop.permute.xlu0 %308
    %310 = vrot.lane.b32.xlu0 %v300, 127
    %v311 = vpop.permute.xlu0 %310
    %312 = vrot.lane.b32.xlu0 %v301, 127
    %v313 = vpop.permute.xlu0 %312
    %v318 = vadd.f32 %v256, %v307
    %v319 = vadd.f32 %v257, %v309
    %v320 = vadd.f32 %v258, %v311
    %v321 = vadd.f32 %v259, %v313
    %s322 = sld [smem:[#allocation2 + $0x4c]]
    %v323 = vstv %s322
    %v324 = vmul.f32 %v323, %v236
    %v325 = vmul.f32 %v323, %v237
    %v326 = vmul.f32 %v323, %v238
    %v327 = vmul.f32 %v323, %v239
    %332 = vrot.lane.b32.xlu0 %v324, 127
    %v333 = vpop.permute.xlu0 %332
    %334 = vrot.lane.b32.xlu0 %v325, 127
    %v335 = vpop.permute.xlu0 %334
    %336 = vrot.lane.b32.xlu0 %v326, 127
    %v337 = vpop.permute.xlu0 %336
    %338 = vrot.lane.b32.xlu0 %v327, 127
    %v339 = vpop.permute.xlu0 %338
    %v344 = vadd.f32 %v266, %v333
    %v345 = vadd.f32 %v267, %v335
    %v346 = vadd.f32 %v268, %v337
    %v347 = vadd.f32 %v269, %v339
    %s348 = sld [smem:[#allocation2 + $0x5]]
    %v349 = vstv %s348
    %v350 = vmul.f32 %v349, %v236
    %v351 = vmul.f32 %v349, %v237
    %v352 = vmul.f32 %v349, %v238
    %v353 = vmul.f32 %v349, %v239
    %358 = vrot.lane.b32.xlu0 %v350, 126
    %v359 = vpop.permute.xlu0 %358
    %360 = vrot.lane.b32.xlu0 %v351, 126
    %v361 = vpop.permute.xlu0 %360
    %362 = vrot.lane.b32.xlu0 %v352, 126
    %v363 = vpop.permute.xlu0 %362
    %364 = vrot.lane.b32.xlu0 %v353, 126
    %v365 = vpop.permute.xlu0 %364
    %v370 = vadd.f32 %v292, %v359
    %v371 = vadd.f32 %v293, %v361
    %v372 = vadd.f32 %v294, %v363
    %v373 = vadd.f32 %v295, %v365
    %s374 = sld [smem:[#allocation2 + $0x29]]
    %v375 = vstv %s374
    %v376 = vmul.f32 %v375, %v236
    %v377 = vmul.f32 %v375, %v237
    %v378 = vmul.f32 %v375, %v238
    %v379 = vmul.f32 %v375, %v239
    %384 = vrot.lane.b32.xlu0 %v376, 126
    %v385 = vpop.permute.xlu0 %384
    %386 = vrot.lane.b32.xlu0 %v377, 126
    %v387 = vpop.permute.xlu0 %386
    %388 = vrot.lane.b32.xlu0 %v378, 126
    %v389 = vpop.permute.xlu0 %388
    %390 = vrot.lane.b32.xlu0 %v379, 126
    %v391 = vpop.permute.xlu0 %390
    %v396 = vadd.f32 %v318, %v385
    %v397 = vadd.f32 %v319, %v387
    %v398 = vadd.f32 %v320, %v389
    %v399 = vadd.f32 %v321, %v391
    %s400 = sld [smem:[#allocation2 + $0x4d]]
    %v401 = vstv %s400
    %v402 = vmul.f32 %v401, %v236
    %v403 = vmul.f32 %v401, %v237
    %v404 = vmul.f32 %v401, %v238
    %v405 = vmul.f32 %v401, %v239
    %410 = vrot.lane.b32.xlu0 %v402, 126
    %v411 = vpop.permute.xlu0 %410
    %412 = vrot.lane.b32.xlu0 %v403, 126
    %v413 = vpop.permute.xlu0 %412
    %414 = vrot.lane.b32.xlu0 %v404, 126
    %v415 = vpop.permute.xlu0 %414
    %416 = vrot.lane.b32.xlu0 %v405, 126
    %v417 = vpop.permute.xlu0 %416
    %v422 = vadd.f32 %v344, %v411
    %v423 = vadd.f32 %v345, %v413
    %v424 = vadd.f32 %v346, %v415
    %v425 = vadd.f32 %v347, %v417
    %v426 = vld [vmem:[%s0 + $0x2] sm:$0xff]
    %v427 = vld [vmem:[%s0 + $0xa] sm:$0xff]
    %v428 = vld [vmem:[%s0 + $0x62] sm:$0xff]
    %v429 = vld [vmem:[%s0 + $0x6a] sm:$0xff]
    %s430 = sld [smem:[#allocation2 + $0x6]]
    %v431 = vstv %s430
    %v432 = vmul.f32 %v431, %v426
    %v433 = vmul.f32 %v431, %v427
    %v434 = vmul.f32 %v431, %v428
    %v435 = vmul.f32 %v431, %v429
    %v436 = vadd.f32 %v370, %v432
    %v437 = vadd.f32 %v371, %v433
    %v438 = vadd.f32 %v372, %v434
    %v439 = vadd.f32 %v373, %v435
    %s440 = sld [smem:[#allocation2 + $0x2a]]
    %v441 = vstv %s440
    %v442 = vmul.f32 %v441, %v426
    %v443 = vmul.f32 %v441, %v427
    %v444 = vmul.f32 %v441, %v428
    %v445 = vmul.f32 %v441, %v429
    %v446 = vadd.f32 %v396, %v442
    %v447 = vadd.f32 %v397, %v443
    %v448 = vadd.f32 %v398, %v444
    %v449 = vadd.f32 %v399, %v445
    %s450 = sld [smem:[#allocation2 + $0x4e]]
    %v451 = vstv %s450
    %v452 = vmul.f32 %v451, %v426
    %v453 = vmul.f32 %v451, %v427
    %v454 = vmul.f32 %v451, %v428
    %v455 = vmul.f32 %v451, %v429
    %v456 = vadd.f32 %v422, %v452
    %v457 = vadd.f32 %v423, %v453
    %v458 = vadd.f32 %v424, %v454
    %v459 = vadd.f32 %v425, %v455
    %s460 = sld [smem:[#allocation2 + $0x7]]
    %v461 = vstv %s460
    %v462 = vmul.f32 %v461, %v426
    %v463 = vmul.f32 %v461, %v427
    %v464 = vmul.f32 %v461, %v428
    %v465 = vmul.f32 %v461, %v429
    %470 = vrot.lane.b32.xlu0 %v462, 127
    %v471 = vpop.permute.xlu0 %470
    %472 = vrot.lane.b32.xlu0 %v463, 127
    %v473 = vpop.permute.xlu0 %472
    %474 = vrot.lane.b32.xlu0 %v464, 127
    %v475 = vpop.permute.xlu0 %474
    %476 = vrot.lane.b32.xlu0 %v465, 127
    %v477 = vpop.permute.xlu0 %476
    %v482 = vadd.f32 %v436, %v471
    %v483 = vadd.f32 %v437, %v473
    %v484 = vadd.f32 %v438, %v475
    %v485 = vadd.f32 %v439, %v477
    %s486 = sld [smem:[#allocation2 + $0x2b]]
    %v487 = vstv %s486
    %v488 = vmul.f32 %v487, %v426
    %v489 = vmul.f32 %v487, %v427
    %v490 = vmul.f32 %v487, %v428
    %v491 = vmul.f32 %v487, %v429
    %496 = vrot.lane.b32.xlu0 %v488, 127
    %v497 = vpop.permute.xlu0 %496
    %498 = vrot.lane.b32.xlu0 %v489, 127
    %v499 = vpop.permute.xlu0 %498
    %500 = vrot.lane.b32.xlu0 %v490, 127
    %v501 = vpop.permute.xlu0 %500
    %502 = vrot.lane.b32.xlu0 %v491, 127
    %v503 = vpop.permute.xlu0 %502
    %v508 = vadd.f32 %v446, %v497
    %v509 = vadd.f32 %v447, %v499
    %v510 = vadd.f32 %v448, %v501
    %v511 = vadd.f32 %v449, %v503
    %s512 = sld [smem:[#allocation2 + $0x4f]]
    %v513 = vstv %s512
    %v514 = vmul.f32 %v513, %v426
    %v515 = vmul.f32 %v513, %v427
    %v516 = vmul.f32 %v513, %v428
    %v517 = vmul.f32 %v513, %v429
    %522 = vrot.lane.b32.xlu0 %v514, 127
    %v523 = vpop.permute.xlu0 %522
    %524 = vrot.lane.b32.xlu0 %v515, 127
    %v525 = vpop.permute.xlu0 %524
    %526 = vrot.lane.b32.xlu0 %v516, 127
    %v527 = vpop.permute.xlu0 %526
    %528 = vrot.lane.b32.xlu0 %v517, 127
    %v529 = vpop.permute.xlu0 %528
    %v534 = vadd.f32 %v456, %v523
    %v535 = vadd.f32 %v457, %v525
    %v536 = vadd.f32 %v458, %v527
    %v537 = vadd.f32 %v459, %v529
    %s538 = sld [smem:[#allocation2 + $0x8]]
    %v539 = vstv %s538
    %v540 = vmul.f32 %v539, %v426
    %v541 = vmul.f32 %v539, %v427
    %v542 = vmul.f32 %v539, %v428
    %v543 = vmul.f32 %v539, %v429
    %548 = vrot.lane.b32.xlu0 %v540, 126
    %v549 = vpop.permute.xlu0 %548
    %550 = vrot.lane.b32.xlu0 %v541, 126
    %v551 = vpop.permute.xlu0 %550
    %552 = vrot.lane.b32.xlu0 %v542, 126
    %v553 = vpop.permute.xlu0 %552
    %554 = vrot.lane.b32.xlu0 %v543, 126
    %v555 = vpop.permute.xlu0 %554
    %v560 = vadd.f32 %v482, %v549
    %v561 = vadd.f32 %v483, %v551
    %v562 = vadd.f32 %v484, %v553
    %v563 = vadd.f32 %v485, %v555
    %s564 = sld [smem:[#allocation2 + $0x2c]]
    %v565 = vstv %s564
    %v566 = vmul.f32 %v565, %v426
    %v567 = vmul.f32 %v565, %v427
    %v568 = vmul.f32 %v565, %v428
    %v569 = vmul.f32 %v565, %v429
    %574 = vrot.lane.b32.xlu0 %v566, 126
    %v575 = vpop.permute.xlu0 %574
    %576 = vrot.lane.b32.xlu0 %v567, 126
    %v577 = vpop.permute.xlu0 %576
    %578 = vrot.lane.b32.xlu0 %v568, 126
    %v579 = vpop.permute.xlu0 %578
    %580 = vrot.lane.b32.xlu0 %v569, 126
    %v581 = vpop.permute.xlu0 %580
    %v586 = vadd.f32 %v508, %v575
    %v587 = vadd.f32 %v509, %v577
    %v588 = vadd.f32 %v510, %v579
    %v589 = vadd.f32 %v511, %v581
    %s590 = sld [smem:[#allocation2 + $0x50]]
    %v591 = vstv %s590
    %v592 = vmul.f32 %v591, %v426
    %v593 = vmul.f32 %v591, %v427
    %v594 = vmul.f32 %v591, %v428
    %v595 = vmul.f32 %v591, %v429
    %600 = vrot.lane.b32.xlu0 %v592, 126
    %v601 = vpop.permute.xlu0 %600
    %602 = vrot.lane.b32.xlu0 %v593, 126
    %v603 = vpop.permute.xlu0 %602
    %604 = vrot.lane.b32.xlu0 %v594, 126
    %v605 = vpop.permute.xlu0 %604
    %606 = vrot.lane.b32.xlu0 %v595, 126
    %v607 = vpop.permute.xlu0 %606
    %v612 = vadd.f32 %v534, %v601
    %v613 = vadd.f32 %v535, %v603
    %v614 = vadd.f32 %v536, %v605
    %v615 = vadd.f32 %v537, %v607
    %s616 = scalar_lea.vmem %s0, 24
    %v617 = vld [vmem:[%s616] sm:$0xff]
    %v618 = vld [vmem:[%s616 + $0x8] sm:$0xff]
    %v619 = vld [vmem:[%s616 + $0x60] sm:$0xff]
    %v620 = vld [vmem:[%s616 + $0x68] sm:$0xff]
    %s621 = sld [smem:[#allocation2 + $0x9]]
    %v622 = vstv %s621
    %v623 = vmul.f32 %v622, %v617
    %v624 = vmul.f32 %v622, %v618
    %v625 = vmul.f32 %v622, %v619
    %v626 = vmul.f32 %v622, %v620
    %v627 = vadd.f32 %v560, %v623
    %v628 = vadd.f32 %v561, %v624
    %v629 = vadd.f32 %v562, %v625
    %v630 = vadd.f32 %v563, %v626
    %s631 = sld [smem:[#allocation2 + $0x2d]]
    %v632 = vstv %s631
    %v633 = vmul.f32 %v632, %v617
    %v634 = vmul.f32 %v632, %v618
    %v635 = vmul.f32 %v632, %v619
    %v636 = vmul.f32 %v632, %v620
    %v637 = vadd.f32 %v586, %v633
    %v638 = vadd.f32 %v587, %v634
    %v639 = vadd.f32 %v588, %v635
    %v640 = vadd.f32 %v589, %v636
    %s641 = sld [smem:[#allocation2 + $0x51]]
    %v642 = vstv %s641
    %v643 = vmul.f32 %v642, %v617
    %v644 = vmul.f32 %v642, %v618
    %v645 = vmul.f32 %v642, %v619
    %v646 = vmul.f32 %v642, %v620
    %v647 = vadd.f32 %v612, %v643
    %v648 = vadd.f32 %v613, %v644
    %v649 = vadd.f32 %v614, %v645
    %v650 = vadd.f32 %v615, %v646
    %s651 = sld [smem:[#allocation2 + $0xa]]
    %v652 = vstv %s651
    %v653 = vmul.f32 %v652, %v617
    %v654 = vmul.f32 %v652, %v618
    %v655 = vmul.f32 %v652, %v619
    %v656 = vmul.f32 %v652, %v620
    %661 = vrot.lane.b32.xlu0 %v653, 127
    %v662 = vpop.permute.xlu0 %661
    %663 = vrot.lane.b32.xlu0 %v654, 127
    %v664 = vpop.permute.xlu0 %663
    %665 = vrot.lane.b32.xlu0 %v655, 127
    %v666 = vpop.permute.xlu0 %665
    %667 = vrot.lane.b32.xlu0 %v656, 127
    %v668 = vpop.permute.xlu0 %667
    %v673 = vadd.f32 %v627, %v662
    %v674 = vadd.f32 %v628, %v664
    %v675 = vadd.f32 %v629, %v666
    %v676 = vadd.f32 %v630, %v668
    %s677 = sld [smem:[#allocation2 + $0x2e]]
    %v678 = vstv %s677
    %v679 = vmul.f32 %v678, %v617
    %v680 = vmul.f32 %v678, %v618
    %v681 = vmul.f32 %v678, %v619
    %v682 = vmul.f32 %v678, %v620
    %687 = vrot.lane.b32.xlu0 %v679, 127
    %v688 = vpop.permute.xlu0 %687
    %689 = vrot.lane.b32.xlu0 %v680, 127
    %v690 = vpop.permute.xlu0 %689
    %691 = vrot.lane.b32.xlu0 %v681, 127
    %v692 = vpop.permute.xlu0 %691
    %693 = vrot.lane.b32.xlu0 %v682, 127
    %v694 = vpop.permute.xlu0 %693
    %v699 = vadd.f32 %v637, %v688
    %v700 = vadd.f32 %v638, %v690
    %v701 = vadd.f32 %v639, %v692
    %v702 = vadd.f32 %v640, %v694
    %s703 = sld [smem:[#allocation2 + $0x52]]
    %v704 = vstv %s703
    %v705 = vmul.f32 %v704, %v617
    %v706 = vmul.f32 %v704, %v618
    %v707 = vmul.f32 %v704, %v619
    %v708 = vmul.f32 %v704, %v620
    %713 = vrot.lane.b32.xlu0 %v705, 127
    %v714 = vpop.permute.xlu0 %713
    %715 = vrot.lane.b32.xlu0 %v706, 127
    %v716 = vpop.permute.xlu0 %715
    %717 = vrot.lane.b32.xlu0 %v707, 127
    %v718 = vpop.permute.xlu0 %717
    %719 = vrot.lane.b32.xlu0 %v708, 127
    %v720 = vpop.permute.xlu0 %719
    %v725 = vadd.f32 %v647, %v714
    %v726 = vadd.f32 %v648, %v716
    %v727 = vadd.f32 %v649, %v718
    %v728 = vadd.f32 %v650, %v720
    %s729 = sld [smem:[#allocation2 + $0xb]]
    %v730 = vstv %s729
    %v731 = vmul.f32 %v730, %v617
    %v732 = vmul.f32 %v730, %v618
    %v733 = vmul.f32 %v730, %v619
    %v734 = vmul.f32 %v730, %v620
    %739 = vrot.lane.b32.xlu0 %v731, 126
    %v740 = vpop.permute.xlu0 %739
    %741 = vrot.lane.b32.xlu0 %v732, 126
    %v742 = vpop.permute.xlu0 %741
    %743 = vrot.lane.b32.xlu0 %v733, 126
    %v744 = vpop.permute.xlu0 %743
    %745 = vrot.lane.b32.xlu0 %v734, 126
    %v746 = vpop.permute.xlu0 %745
    %v751 = vadd.f32 %v673, %v740
    %v752 = vadd.f32 %v674, %v742
    %v753 = vadd.f32 %v675, %v744
    %v754 = vadd.f32 %v676, %v746
    %s755 = sld [smem:[#allocation2 + $0x2f]]
    %v756 = vstv %s755
    %v757 = vmul.f32 %v756, %v617
    %v758 = vmul.f32 %v756, %v618
    %v759 = vmul.f32 %v756, %v619
    %v760 = vmul.f32 %v756, %v620
    %765 = vrot.lane.b32.xlu0 %v757, 126
    %v766 = vpop.permute.xlu0 %765
    %767 = vrot.lane.b32.xlu0 %v758, 126
    %v768 = vpop.permute.xlu0 %767
    %769 = vrot.lane.b32.xlu0 %v759, 126
    %v770 = vpop.permute.xlu0 %769
    %771 = vrot.lane.b32.xlu0 %v760, 126
    %v772 = vpop.permute.xlu0 %771
    %v777 = vadd.f32 %v699, %v766
    %v778 = vadd.f32 %v700, %v768
    %v779 = vadd.f32 %v701, %v770
    %v780 = vadd.f32 %v702, %v772
    %s781 = sld [smem:[#allocation2 + $0x53]]
    %v782 = vstv %s781
    %v783 = vmul.f32 %v782, %v617
    %v784 = vmul.f32 %v782, %v618
    %v785 = vmul.f32 %v782, %v619
    %v786 = vmul.f32 %v782, %v620
    %791 = vrot.lane.b32.xlu0 %v783, 126
    %v792 = vpop.permute.xlu0 %791
    %793 = vrot.lane.b32.xlu0 %v784, 126
    %v794 = vpop.permute.xlu0 %793
    %795 = vrot.lane.b32.xlu0 %v785, 126
    %v796 = vpop.permute.xlu0 %795
    %797 = vrot.lane.b32.xlu0 %v786, 126
    %v798 = vpop.permute.xlu0 %797
    %v803 = vadd.f32 %v725, %v792
    %v804 = vadd.f32 %v726, %v794
    %v805 = vadd.f32 %v727, %v796
    %v806 = vadd.f32 %v728, %v798
    %v807 = vld [vmem:[%s616 + $0x1] sm:$0xff]
    %v808 = vld [vmem:[%s616 + $0x9] sm:$0xff]
    %v809 = vld [vmem:[%s616 + $0x61] sm:$0xff]
    %v810 = vld [vmem:[%s616 + $0x69] sm:$0xff]
    %s811 = sld [smem:[#allocation2 + $0xc]]
    %v812 = vstv %s811
    %v813 = vmul.f32 %v812, %v807
    %v814 = vmul.f32 %v812, %v808
    %v815 = vmul.f32 %v812, %v809
    %v816 = vmul.f32 %v812, %v810
    %v817 = vadd.f32 %v751, %v813
    %v818 = vadd.f32 %v752, %v814
    %v819 = vadd.f32 %v753, %v815
    %v820 = vadd.f32 %v754, %v816
    %s821 = sld [smem:[#allocation2 + $0x30]]
    %v822 = vstv %s821
    %v823 = vmul.f32 %v822, %v807
    %v824 = vmul.f32 %v822, %v808
    %v825 = vmul.f32 %v822, %v809
    %v826 = vmul.f32 %v822, %v810
    %v827 = vadd.f32 %v777, %v823
    %v828 = vadd.f32 %v778, %v824
    %v829 = vadd.f32 %v779, %v825
    %v830 = vadd.f32 %v780, %v826
    %s831 = sld [smem:[#allocation2 + $0x54]]
    %v832 = vstv %s831
    %v833 = vmul.f32 %v832, %v807
    %v834 = vmul.f32 %v832, %v808
    %v835 = vmul.f32 %v832, %v809
    %v836 = vmul.f32 %v832, %v810
    %v837 = vadd.f32 %v803, %v833
    %v838 = vadd.f32 %v804, %v834
    %v839 = vadd.f32 %v805, %v835
    %v840 = vadd.f32 %v806, %v836
    %s841 = sld [smem:[#allocation2 + $0xd]]
    %v842 = vstv %s841
    %v843 = vmul.f32 %v842, %v807
    %v844 = vmul.f32 %v842, %v808
    %v845 = vmul.f32 %v842, %v809
    %v846 = vmul.f32 %v842, %v810
    %851 = vrot.lane.b32.xlu0 %v843, 127
    %v852 = vpop.permute.xlu0 %851
    %853 = vrot.lane.b32.xlu0 %v844, 127
    %v854 = vpop.permute.xlu0 %853
    %855 = vrot.lane.b32.xlu0 %v845, 127
    %v856 = vpop.permute.xlu0 %855
    %857 = vrot.lane.b32.xlu0 %v846, 127
    %v858 = vpop.permute.xlu0 %857
    %v863 = vadd.f32 %v817, %v852
    %v864 = vadd.f32 %v818, %v854
    %v865 = vadd.f32 %v819, %v856
    %v866 = vadd.f32 %v820, %v858
    %s867 = sld [smem:[#allocation2 + $0x31]]
    %v868 = vstv %s867
    %v869 = vmul.f32 %v868, %v807
    %v870 = vmul.f32 %v868, %v808
    %v871 = vmul.f32 %v868, %v809
    %v872 = vmul.f32 %v868, %v810
    %877 = vrot.lane.b32.xlu0 %v869, 127
    %v878 = vpop.permute.xlu0 %877
    %879 = vrot.lane.b32.xlu0 %v870, 127
    %v880 = vpop.permute.xlu0 %879
    %881 = vrot.lane.b32.xlu0 %v871, 127
    %v882 = vpop.permute.xlu0 %881
    %883 = vrot.lane.b32.xlu0 %v872, 127
    %v884 = vpop.permute.xlu0 %883
    %v889 = vadd.f32 %v827, %v878
    %v890 = vadd.f32 %v828, %v880
    %v891 = vadd.f32 %v829, %v882
    %v892 = vadd.f32 %v830, %v884
    %s893 = sld [smem:[#allocation2 + $0x55]]
    %v894 = vstv %s893
    %v895 = vmul.f32 %v894, %v807
    %v896 = vmul.f32 %v894, %v808
    %v897 = vmul.f32 %v894, %v809
    %v898 = vmul.f32 %v894, %v810
    %903 = vrot.lane.b32.xlu0 %v895, 127
    %v904 = vpop.permute.xlu0 %903
    %905 = vrot.lane.b32.xlu0 %v896, 127
    %v906 = vpop.permute.xlu0 %905
    %907 = vrot.lane.b32.xlu0 %v897, 127
    %v908 = vpop.permute.xlu0 %907
    %909 = vrot.lane.b32.xlu0 %v898, 127
    %v910 = vpop.permute.xlu0 %909
    %v915 = vadd.f32 %v837, %v904
    %v916 = vadd.f32 %v838, %v906
    %v917 = vadd.f32 %v839, %v908
    %v918 = vadd.f32 %v840, %v910
    %s919 = sld [smem:[#allocation2 + $0xe]]
    %v920 = vstv %s919
    %v921 = vmul.f32 %v920, %v807
    %v922 = vmul.f32 %v920, %v808
    %v923 = vmul.f32 %v920, %v809
    %v924 = vmul.f32 %v920, %v810
    %929 = vrot.lane.b32.xlu0 %v921, 126
    %v930 = vpop.permute.xlu0 %929
    %931 = vrot.lane.b32.xlu0 %v922, 126
    %v932 = vpop.permute.xlu0 %931
    %933 = vrot.lane.b32.xlu0 %v923, 126
    %v934 = vpop.permute.xlu0 %933
    %935 = vrot.lane.b32.xlu0 %v924, 126
    %v936 = vpop.permute.xlu0 %935
    %v941 = vadd.f32 %v863, %v930
    %v942 = vadd.f32 %v864, %v932
    %v943 = vadd.f32 %v865, %v934
    %v944 = vadd.f32 %v866, %v936
    %s945 = sld [smem:[#allocation2 + $0x32]]
    %v946 = vstv %s945
    %v947 = vmul.f32 %v946, %v807
    %v948 = vmul.f32 %v946, %v808
    %v949 = vmul.f32 %v946, %v809
    %v950 = vmul.f32 %v946, %v810
    %955 = vrot.lane.b32.xlu0 %v947, 126
    %v956 = vpop.permute.xlu0 %955
    %957 = vrot.lane.b32.xlu0 %v948, 126
    %v958 = vpop.permute.xlu0 %957
    %959 = vrot.lane.b32.xlu0 %v949, 126
    %v960 = vpop.permute.xlu0 %959
    %961 = vrot.lane.b32.xlu0 %v950, 126
    %v962 = vpop.permute.xlu0 %961
    %v967 = vadd.f32 %v889, %v956
    %v968 = vadd.f32 %v890, %v958
    %v969 = vadd.f32 %v891, %v960
    %v970 = vadd.f32 %v892, %v962
    %s971 = sld [smem:[#allocation2 + $0x56]]
    %v972 = vstv %s971
    %v973 = vmul.f32 %v972, %v807
    %v974 = vmul.f32 %v972, %v808
    %v975 = vmul.f32 %v972, %v809
    %v976 = vmul.f32 %v972, %v810
    %981 = vrot.lane.b32.xlu0 %v973, 126
    %v982 = vpop.permute.xlu0 %981
    %983 = vrot.lane.b32.xlu0 %v974, 126
    %v984 = vpop.permute.xlu0 %983
    %985 = vrot.lane.b32.xlu0 %v975, 126
    %v986 = vpop.permute.xlu0 %985
    %987 = vrot.lane.b32.xlu0 %v976, 126
    %v988 = vpop.permute.xlu0 %987
    %v993 = vadd.f32 %v915, %v982
    %v994 = vadd.f32 %v916, %v984
    %v995 = vadd.f32 %v917, %v986
    %v996 = vadd.f32 %v918, %v988
    %v997 = vld [vmem:[%s616 + $0x2] sm:$0xff]
    %v998 = vld [vmem:[%s616 + $0xa] sm:$0xff]
    %v999 = vld [vmem:[%s616 + $0x62] sm:$0xff]
    %v1000 = vld [vmem:[%s616 + $0x6a] sm:$0xff]
    %s1001 = sld [smem:[#allocation2 + $0xf]]
    %v1002 = vstv %s1001
    %v1003 = vmul.f32 %v1002, %v997
    %v1004 = vmul.f32 %v1002, %v998
    %v1005 = vmul.f32 %v1002, %v999
    %v1006 = vmul.f32 %v1002, %v1000
    %v1007 = vadd.f32 %v941, %v1003
    %v1008 = vadd.f32 %v942, %v1004
    %v1009 = vadd.f32 %v943, %v1005
    %v1010 = vadd.f32 %v944, %v1006
    %s1011 = sld [smem:[#allocation2 + $0x33]]
    %v1012 = vstv %s1011
    %v1013 = vmul.f32 %v1012, %v997
    %v1014 = vmul.f32 %v1012, %v998
    %v1015 = vmul.f32 %v1012, %v999
    %v1016 = vmul.f32 %v1012, %v1000
    %v1017 = vadd.f32 %v967, %v1013
    %v1018 = vadd.f32 %v968, %v1014
    %v1019 = vadd.f32 %v969, %v1015
    %v1020 = vadd.f32 %v970, %v1016
    %s1021 = sld [smem:[#allocation2 + $0x57]]
    %v1022 = vstv %s1021
    %v1023 = vmul.f32 %v1022, %v997
    %v1024 = vmul.f32 %v1022, %v998
    %v1025 = vmul.f32 %v1022, %v999
    %v1026 = vmul.f32 %v1022, %v1000
    %v1027 = vadd.f32 %v993, %v1023
    %v1028 = vadd.f32 %v994, %v1024
    %v1029 = vadd.f32 %v995, %v1025
    %v1030 = vadd.f32 %v996, %v1026
    %s1031 = sld [smem:[#allocation2 + $0x10]]
    %v1032 = vstv %s1031
    %v1033 = vmul.f32 %v1032, %v997
    %v1034 = vmul.f32 %v1032, %v998
    %v1035 = vmul.f32 %v1032, %v999
    %v1036 = vmul.f32 %v1032, %v1000
    %1041 = vrot.lane.b32.xlu0 %v1033, 127
    %v1042 = vpop.permute.xlu0 %1041
    %1043 = vrot.lane.b32.xlu0 %v1034, 127
    %v1044 = vpop.permute.xlu0 %1043
    %1045 = vrot.lane.b32.xlu0 %v1035, 127
    %v1046 = vpop.permute.xlu0 %1045
    %1047 = vrot.lane.b32.xlu0 %v1036, 127
    %v1048 = vpop.permute.xlu0 %1047
    %v1053 = vadd.f32 %v1007, %v1042
    %v1054 = vadd.f32 %v1008, %v1044
    %v1055 = vadd.f32 %v1009, %v1046
    %v1056 = vadd.f32 %v1010, %v1048
    %s1057 = sld [smem:[#allocation2 + $0x34]]
    %v1058 = vstv %s1057
    %v1059 = vmul.f32 %v1058, %v997
    %v1060 = vmul.f32 %v1058, %v998
    %v1061 = vmul.f32 %v1058, %v999
    %v1062 = vmul.f32 %v1058, %v1000
    %1067 = vrot.lane.b32.xlu0 %v1059, 127
    %v1068 = vpop.permute.xlu0 %1067
    %1069 = vrot.lane.b32.xlu0 %v1060, 127
    %v1070 = vpop.permute.xlu0 %1069
    %1071 = vrot.lane.b32.xlu0 %v1061, 127
    %v1072 = vpop.permute.xlu0 %1071
    %1073 = vrot.lane.b32.xlu0 %v1062, 127
    %v1074 = vpop.permute.xlu0 %1073
    %v1079 = vadd.f32 %v1017, %v1068
    %v1080 = vadd.f32 %v1018, %v1070
    %v1081 = vadd.f32 %v1019, %v1072
    %v1082 = vadd.f32 %v1020, %v1074
    %s1083 = sld [smem:[#allocation2 + $0x58]]
    %v1084 = vstv %s1083
    %v1085 = vmul.f32 %v1084, %v997
    %v1086 = vmul.f32 %v1084, %v998
    %v1087 = vmul.f32 %v1084, %v999
    %v1088 = vmul.f32 %v1084, %v1000
    %1093 = vrot.lane.b32.xlu0 %v1085, 127
    %v1094 = vpop.permute.xlu0 %1093
    %1095 = vrot.lane.b32.xlu0 %v1086, 127
    %v1096 = vpop.permute.xlu0 %1095
    %1097 = vrot.lane.b32.xlu0 %v1087, 127
    %v1098 = vpop.permute.xlu0 %1097
    %1099 = vrot.lane.b32.xlu0 %v1088, 127
    %v1100 = vpop.permute.xlu0 %1099
    %v1105 = vadd.f32 %v1027, %v1094
    %v1106 = vadd.f32 %v1028, %v1096
    %v1107 = vadd.f32 %v1029, %v1098
    %v1108 = vadd.f32 %v1030, %v1100
    %s1109 = sld [smem:[#allocation2 + $0x11]]
    %v1110 = vstv %s1109
    %v1111 = vmul.f32 %v1110, %v997
    %v1112 = vmul.f32 %v1110, %v998
    %v1113 = vmul.f32 %v1110, %v999
    %v1114 = vmul.f32 %v1110, %v1000
    %1119 = vrot.lane.b32.xlu0 %v1111, 126
    %v1120 = vpop.permute.xlu0 %1119
    %1121 = vrot.lane.b32.xlu0 %v1112, 126
    %v1122 = vpop.permute.xlu0 %1121
    %1123 = vrot.lane.b32.xlu0 %v1113, 126
    %v1124 = vpop.permute.xlu0 %1123
    %1125 = vrot.lane.b32.xlu0 %v1114, 126
    %v1126 = vpop.permute.xlu0 %1125
    %v1131 = vadd.f32 %v1053, %v1120
    %v1132 = vadd.f32 %v1054, %v1122
    %v1133 = vadd.f32 %v1055, %v1124
    %v1134 = vadd.f32 %v1056, %v1126
    %s1135 = sld [smem:[#allocation2 + $0x35]]
    %v1136 = vstv %s1135
    %v1137 = vmul.f32 %v1136, %v997
    %v1138 = vmul.f32 %v1136, %v998
    %v1139 = vmul.f32 %v1136, %v999
    %v1140 = vmul.f32 %v1136, %v1000
    %1145 = vrot.lane.b32.xlu0 %v1137, 126
    %v1146 = vpop.permute.xlu0 %1145
    %1147 = vrot.lane.b32.xlu0 %v1138, 126
    %v1148 = vpop.permute.xlu0 %1147
    %1149 = vrot.lane.b32.xlu0 %v1139, 126
    %v1150 = vpop.permute.xlu0 %1149
    %1151 = vrot.lane.b32.xlu0 %v1140, 126
    %v1152 = vpop.permute.xlu0 %1151
    %v1157 = vadd.f32 %v1079, %v1146
    %v1158 = vadd.f32 %v1080, %v1148
    %v1159 = vadd.f32 %v1081, %v1150
    %v1160 = vadd.f32 %v1082, %v1152
    %s1161 = sld [smem:[#allocation2 + $0x59]]
    %v1162 = vstv %s1161
    %v1163 = vmul.f32 %v1162, %v997
    %v1164 = vmul.f32 %v1162, %v998
    %v1165 = vmul.f32 %v1162, %v999
    %v1166 = vmul.f32 %v1162, %v1000
    %1171 = vrot.lane.b32.xlu0 %v1163, 126
    %v1172 = vpop.permute.xlu0 %1171
    %1173 = vrot.lane.b32.xlu0 %v1164, 126
    %v1174 = vpop.permute.xlu0 %1173
    %1175 = vrot.lane.b32.xlu0 %v1165, 126
    %v1176 = vpop.permute.xlu0 %1175
    %1177 = vrot.lane.b32.xlu0 %v1166, 126
    %v1178 = vpop.permute.xlu0 %1177
    %v1183 = vadd.f32 %v1105, %v1172
    %v1184 = vadd.f32 %v1106, %v1174
    %v1185 = vadd.f32 %v1107, %v1176
    %v1186 = vadd.f32 %v1108, %v1178
    %s1187 = scalar_lea.vmem %s0, 48
    %v1188 = vld [vmem:[%s1187] sm:$0xff]
    %v1189 = vld [vmem:[%s1187 + $0x8] sm:$0xff]
    %v1190 = vld [vmem:[%s1187 + $0x60] sm:$0xff]
    %v1191 = vld [vmem:[%s1187 + $0x68] sm:$0xff]
    %s1192 = sld [smem:[#allocation2 + $0x12]]
    %v1193 = vstv %s1192
    %v1194 = vmul.f32 %v1193, %v1188
    %v1195 = vmul.f32 %v1193, %v1189
    %v1196 = vmul.f32 %v1193, %v1190
    %v1197 = vmul.f32 %v1193, %v1191
    %v1198 = vadd.f32 %v1131, %v1194
    %v1199 = vadd.f32 %v1132, %v1195
    %v1200 = vadd.f32 %v1133, %v1196
    %v1201 = vadd.f32 %v1134, %v1197
    %s1202 = sld [smem:[#allocation2 + $0x36]]
    %v1203 = vstv %s1202
    %v1204 = vmul.f32 %v1203, %v1188
    %v1205 = vmul.f32 %v1203, %v1189
    %v1206 = vmul.f32 %v1203, %v1190
    %v1207 = vmul.f32 %v1203, %v1191
    %v1208 = vadd.f32 %v1157, %v1204
    %v1209 = vadd.f32 %v1158, %v1205
    %v1210 = vadd.f32 %v1159, %v1206
    %v1211 = vadd.f32 %v1160, %v1207
    %s1212 = sld [smem:[#allocation2 + $0x5a]]
    %v1213 = vstv %s1212
    %v1214 = vmul.f32 %v1213, %v1188
    %v1215 = vmul.f32 %v1213, %v1189
    %v1216 = vmul.f32 %v1213, %v1190
    %v1217 = vmul.f32 %v1213, %v1191
    %v1218 = vadd.f32 %v1183, %v1214
    %v1219 = vadd.f32 %v1184, %v1215
    %v1220 = vadd.f32 %v1185, %v1216
    %v1221 = vadd.f32 %v1186, %v1217
    %s1222 = sld [smem:[#allocation2 + $0x13]]
    %v1223 = vstv %s1222
    %v1224 = vmul.f32 %v1223, %v1188
    %v1225 = vmul.f32 %v1223, %v1189
    %v1226 = vmul.f32 %v1223, %v1190
    %v1227 = vmul.f32 %v1223, %v1191
    %1232 = vrot.lane.b32.xlu0 %v1224, 127
    %v1233 = vpop.permute.xlu0 %1232
    %1234 = vrot.lane.b32.xlu0 %v1225, 127
    %v1235 = vpop.permute.xlu0 %1234
    %1236 = vrot.lane.b32.xlu0 %v1226, 127
    %v1237 = vpop.permute.xlu0 %1236
    %1238 = vrot.lane.b32.xlu0 %v1227, 127
    %v1239 = vpop.permute.xlu0 %1238
    %v1244 = vadd.f32 %v1198, %v1233
    %v1245 = vadd.f32 %v1199, %v1235
    %v1246 = vadd.f32 %v1200, %v1237
    %v1247 = vadd.f32 %v1201, %v1239
    %s1248 = sld [smem:[#allocation2 + $0x37]]
    %v1249 = vstv %s1248
    %v1250 = vmul.f32 %v1249, %v1188
    %v1251 = vmul.f32 %v1249, %v1189
    %v1252 = vmul.f32 %v1249, %v1190
    %v1253 = vmul.f32 %v1249, %v1191
    %1258 = vrot.lane.b32.xlu0 %v1250, 127
    %v1259 = vpop.permute.xlu0 %1258
    %1260 = vrot.lane.b32.xlu0 %v1251, 127
    %v1261 = vpop.permute.xlu0 %1260
    %1262 = vrot.lane.b32.xlu0 %v1252, 127
    %v1263 = vpop.permute.xlu0 %1262
    %1264 = vrot.lane.b32.xlu0 %v1253, 127
    %v1265 = vpop.permute.xlu0 %1264
    %v1270 = vadd.f32 %v1208, %v1259
    %v1271 = vadd.f32 %v1209, %v1261
    %v1272 = vadd.f32 %v1210, %v1263
    %v1273 = vadd.f32 %v1211, %v1265
    %s1274 = sld [smem:[#allocation2 + $0x5b]]
    %v1275 = vstv %s1274
    %v1276 = vmul.f32 %v1275, %v1188
    %v1277 = vmul.f32 %v1275, %v1189
    %v1278 = vmul.f32 %v1275, %v1190
    %v1279 = vmul.f32 %v1275, %v1191
    %1284 = vrot.lane.b32.xlu0 %v1276, 127
    %v1285 = vpop.permute.xlu0 %1284
    %1286 = vrot.lane.b32.xlu0 %v1277, 127
    %v1287 = vpop.permute.xlu0 %1286
    %1288 = vrot.lane.b32.xlu0 %v1278, 127
    %v1289 = vpop.permute.xlu0 %1288
    %1290 = vrot.lane.b32.xlu0 %v1279, 127
    %v1291 = vpop.permute.xlu0 %1290
    %v1296 = vadd.f32 %v1218, %v1285
    %v1297 = vadd.f32 %v1219, %v1287
    %v1298 = vadd.f32 %v1220, %v1289
    %v1299 = vadd.f32 %v1221, %v1291
    %s1300 = sld [smem:[#allocation2 + $0x14]]
    %v1301 = vstv %s1300
    %v1302 = vmul.f32 %v1301, %v1188
    %v1303 = vmul.f32 %v1301, %v1189
    %v1304 = vmul.f32 %v1301, %v1190
    %v1305 = vmul.f32 %v1301, %v1191
    %1310 = vrot.lane.b32.xlu0 %v1302, 126
    %v1311 = vpop.permute.xlu0 %1310
    %1312 = vrot.lane.b32.xlu0 %v1303, 126
    %v1313 = vpop.permute.xlu0 %1312
    %1314 = vrot.lane.b32.xlu0 %v1304, 126
    %v1315 = vpop.permute.xlu0 %1314
    %1316 = vrot.lane.b32.xlu0 %v1305, 126
    %v1317 = vpop.permute.xlu0 %1316
    %v1322 = vadd.f32 %v1244, %v1311
    %v1323 = vadd.f32 %v1245, %v1313
    %v1324 = vadd.f32 %v1246, %v1315
    %v1325 = vadd.f32 %v1247, %v1317
    %s1326 = sld [smem:[#allocation2 + $0x38]]
    %v1327 = vstv %s1326
    %v1328 = vmul.f32 %v1327, %v1188
    %v1329 = vmul.f32 %v1327, %v1189
    %v1330 = vmul.f32 %v1327, %v1190
    %v1331 = vmul.f32 %v1327, %v1191
    %1336 = vrot.lane.b32.xlu0 %v1328, 126
    %v1337 = vpop.permute.xlu0 %1336
    %1338 = vrot.lane.b32.xlu0 %v1329, 126
    %v1339 = vpop.permute.xlu0 %1338
    %1340 = vrot.lane.b32.xlu0 %v1330, 126
    %v1341 = vpop.permute.xlu0 %1340
    %1342 = vrot.lane.b32.xlu0 %v1331, 126
    %v1343 = vpop.permute.xlu0 %1342
    %v1348 = vadd.f32 %v1270, %v1337
    %v1349 = vadd.f32 %v1271, %v1339
    %v1350 = vadd.f32 %v1272, %v1341
    %v1351 = vadd.f32 %v1273, %v1343
    %s1352 = sld [smem:[#allocation2 + $0x5c]]
    %v1353 = vstv %s1352
    %v1354 = vmul.f32 %v1353, %v1188
    %v1355 = vmul.f32 %v1353, %v1189
    %v1356 = vmul.f32 %v1353, %v1190
    %v1357 = vmul.f32 %v1353, %v1191
    %1362 = vrot.lane.b32.xlu0 %v1354, 126
    %v1363 = vpop.permute.xlu0 %1362
    %1364 = vrot.lane.b32.xlu0 %v1355, 126
    %v1365 = vpop.permute.xlu0 %1364
    %1366 = vrot.lane.b32.xlu0 %v1356, 126
    %v1367 = vpop.permute.xlu0 %1366
    %1368 = vrot.lane.b32.xlu0 %v1357, 126
    %v1369 = vpop.permute.xlu0 %1368
    %v1374 = vadd.f32 %v1296, %v1363
    %v1375 = vadd.f32 %v1297, %v1365
    %v1376 = vadd.f32 %v1298, %v1367
    %v1377 = vadd.f32 %v1299, %v1369
    %v1378 = vld [vmem:[%s1187 + $0x1] sm:$0xff]
    %v1379 = vld [vmem:[%s1187 + $0x9] sm:$0xff]
    %v1380 = vld [vmem:[%s1187 + $0x61] sm:$0xff]
    %v1381 = vld [vmem:[%s1187 + $0x69] sm:$0xff]
    %s1382 = sld [smem:[#allocation2 + $0x15]]
    %v1383 = vstv %s1382
    %v1384 = vmul.f32 %v1383, %v1378
    %v1385 = vmul.f32 %v1383, %v1379
    %v1386 = vmul.f32 %v1383, %v1380
    %v1387 = vmul.f32 %v1383, %v1381
    %v1388 = vadd.f32 %v1322, %v1384
    %v1389 = vadd.f32 %v1323, %v1385
    %v1390 = vadd.f32 %v1324, %v1386
    %v1391 = vadd.f32 %v1325, %v1387
    %s1392 = sld [smem:[#allocation2 + $0x39]]
    %v1393 = vstv %s1392
    %v1394 = vmul.f32 %v1393, %v1378
    %v1395 = vmul.f32 %v1393, %v1379
    %v1396 = vmul.f32 %v1393, %v1380
    %v1397 = vmul.f32 %v1393, %v1381
    %v1398 = vadd.f32 %v1348, %v1394
    %v1399 = vadd.f32 %v1349, %v1395
    %v1400 = vadd.f32 %v1350, %v1396
    %v1401 = vadd.f32 %v1351, %v1397
    %s1402 = sld [smem:[#allocation2 + $0x5d]]
    %v1403 = vstv %s1402
    %v1404 = vmul.f32 %v1403, %v1378
    %v1405 = vmul.f32 %v1403, %v1379
    %v1406 = vmul.f32 %v1403, %v1380
    %v1407 = vmul.f32 %v1403, %v1381
    %v1408 = vadd.f32 %v1374, %v1404
    %v1409 = vadd.f32 %v1375, %v1405
    %v1410 = vadd.f32 %v1376, %v1406
    %v1411 = vadd.f32 %v1377, %v1407
    %s1412 = sld [smem:[#allocation2 + $0x16]]
    %v1413 = vstv %s1412
    %v1414 = vmul.f32 %v1413, %v1378
    %v1415 = vmul.f32 %v1413, %v1379
    %v1416 = vmul.f32 %v1413, %v1380
    %v1417 = vmul.f32 %v1413, %v1381
    %1422 = vrot.lane.b32.xlu0 %v1414, 127
    %v1423 = vpop.permute.xlu0 %1422
    %1424 = vrot.lane.b32.xlu0 %v1415, 127
    %v1425 = vpop.permute.xlu0 %1424
    %1426 = vrot.lane.b32.xlu0 %v1416, 127
    %v1427 = vpop.permute.xlu0 %1426
    %1428 = vrot.lane.b32.xlu0 %v1417, 127
    %v1429 = vpop.permute.xlu0 %1428
    %v1434 = vadd.f32 %v1388, %v1423
    %v1435 = vadd.f32 %v1389, %v1425
    %v1436 = vadd.f32 %v1390, %v1427
    %v1437 = vadd.f32 %v1391, %v1429
    %s1438 = sld [smem:[#allocation2 + $0x3a]]
    %v1439 = vstv %s1438
    %v1440 = vmul.f32 %v1439, %v1378
    %v1441 = vmul.f32 %v1439, %v1379
    %v1442 = vmul.f32 %v1439, %v1380
    %v1443 = vmul.f32 %v1439, %v1381
    %1448 = vrot.lane.b32.xlu0 %v1440, 127
    %v1449 = vpop.permute.xlu0 %1448
    %1450 = vrot.lane.b32.xlu0 %v1441, 127
    %v1451 = vpop.permute.xlu0 %1450
    %1452 = vrot.lane.b32.xlu0 %v1442, 127
    %v1453 = vpop.permute.xlu0 %1452
    %1454 = vrot.lane.b32.xlu0 %v1443, 127
    %v1455 = vpop.permute.xlu0 %1454
    %v1460 = vadd.f32 %v1398, %v1449
    %v1461 = vadd.f32 %v1399, %v1451
    %v1462 = vadd.f32 %v1400, %v1453
    %v1463 = vadd.f32 %v1401, %v1455
    %s1464 = sld [smem:[#allocation2 + $0x5e]]
    %v1465 = vstv %s1464
    %v1466 = vmul.f32 %v1465, %v1378
    %v1467 = vmul.f32 %v1465, %v1379
    %v1468 = vmul.f32 %v1465, %v1380
    %v1469 = vmul.f32 %v1465, %v1381
    %1474 = vrot.lane.b32.xlu0 %v1466, 127
    %v1475 = vpop.permute.xlu0 %1474
    %1476 = vrot.lane.b32.xlu0 %v1467, 127
    %v1477 = vpop.permute.xlu0 %1476
    %1478 = vrot.lane.b32.xlu0 %v1468, 127
    %v1479 = vpop.permute.xlu0 %1478
    %1480 = vrot.lane.b32.xlu0 %v1469, 127
    %v1481 = vpop.permute.xlu0 %1480
    %v1486 = vadd.f32 %v1408, %v1475
    %v1487 = vadd.f32 %v1409, %v1477
    %v1488 = vadd.f32 %v1410, %v1479
    %v1489 = vadd.f32 %v1411, %v1481
    %s1490 = sld [smem:[#allocation2 + $0x17]]
    %v1491 = vstv %s1490
    %v1492 = vmul.f32 %v1491, %v1378
    %v1493 = vmul.f32 %v1491, %v1379
    %v1494 = vmul.f32 %v1491, %v1380
    %v1495 = vmul.f32 %v1491, %v1381
    %1500 = vrot.lane.b32.xlu0 %v1492, 126
    %v1501 = vpop.permute.xlu0 %1500
    %1502 = vrot.lane.b32.xlu0 %v1493, 126
    %v1503 = vpop.permute.xlu0 %1502
    %1504 = vrot.lane.b32.xlu0 %v1494, 126
    %v1505 = vpop.permute.xlu0 %1504
    %1506 = vrot.lane.b32.xlu0 %v1495, 126
    %v1507 = vpop.permute.xlu0 %1506
    %v1512 = vadd.f32 %v1434, %v1501
    %v1513 = vadd.f32 %v1435, %v1503
    %v1514 = vadd.f32 %v1436, %v1505
    %v1515 = vadd.f32 %v1437, %v1507
    %s1516 = sld [smem:[#allocation2 + $0x3b]]
    %v1517 = vstv %s1516
    %v1518 = vmul.f32 %v1517, %v1378
    %v1519 = vmul.f32 %v1517, %v1379
    %v1520 = vmul.f32 %v1517, %v1380
    %v1521 = vmul.f32 %v1517, %v1381
    %1526 = vrot.lane.b32.xlu0 %v1518, 126
    %v1527 = vpop.permute.xlu0 %1526
    %1528 = vrot.lane.b32.xlu0 %v1519, 126
    %v1529 = vpop.permute.xlu0 %1528
    %1530 = vrot.lane.b32.xlu0 %v1520, 126
    %v1531 = vpop.permute.xlu0 %1530
    %1532 = vrot.lane.b32.xlu0 %v1521, 126
    %v1533 = vpop.permute.xlu0 %1532
    %v1538 = vadd.f32 %v1460, %v1527
    %v1539 = vadd.f32 %v1461, %v1529
    %v1540 = vadd.f32 %v1462, %v1531
    %v1541 = vadd.f32 %v1463, %v1533
    %s1542 = sld [smem:[#allocation2 + $0x5f]]
    %v1543 = vstv %s1542
    %v1544 = vmul.f32 %v1543, %v1378
    %v1545 = vmul.f32 %v1543, %v1379
    %v1546 = vmul.f32 %v1543, %v1380
    %v1547 = vmul.f32 %v1543, %v1381
    %1552 = vrot.lane.b32.xlu0 %v1544, 126
    %v1553 = vpop.permute.xlu0 %1552
    %1554 = vrot.lane.b32.xlu0 %v1545, 126
    %v1555 = vpop.permute.xlu0 %1554
    %1556 = vrot.lane.b32.xlu0 %v1546, 126
    %v1557 = vpop.permute.xlu0 %1556
    %1558 = vrot.lane.b32.xlu0 %v1547, 126
    %v1559 = vpop.permute.xlu0 %1558
    %v1564 = vadd.f32 %v1486, %v1553
    %v1565 = vadd.f32 %v1487, %v1555
    %v1566 = vadd.f32 %v1488, %v1557
    %v1567 = vadd.f32 %v1489, %v1559
    %v1568 = vld [vmem:[%s1187 + $0x2] sm:$0xff]
    %v1569 = vld [vmem:[%s1187 + $0xa] sm:$0xff]
    %v1570 = vld [vmem:[%s1187 + $0x62] sm:$0xff]
    %v1571 = vld [vmem:[%s1187 + $0x6a] sm:$0xff]
    %s1572 = sld [smem:[#allocation2 + $0x18]]
    %v1573 = vstv %s1572
    %v1574 = vmul.f32 %v1573, %v1568
    %v1575 = vmul.f32 %v1573, %v1569
    %v1576 = vmul.f32 %v1573, %v1570
    %v1577 = vmul.f32 %v1573, %v1571
    %v1578 = vadd.f32 %v1512, %v1574
    %v1579 = vadd.f32 %v1513, %v1575
    %v1580 = vadd.f32 %v1514, %v1576
    %v1581 = vadd.f32 %v1515, %v1577
    %s1582 = sld [smem:[#allocation2 + $0x3c]]
    %v1583 = vstv %s1582
    %v1584 = vmul.f32 %v1583, %v1568
    %v1585 = vmul.f32 %v1583, %v1569
    %v1586 = vmul.f32 %v1583, %v1570
    %v1587 = vmul.f32 %v1583, %v1571
    %v1588 = vadd.f32 %v1538, %v1584
    %v1589 = vadd.f32 %v1539, %v1585
    %v1590 = vadd.f32 %v1540, %v1586
    %v1591 = vadd.f32 %v1541, %v1587
    %s1592 = sld [smem:[#allocation2 + $0x60]]
    %v1593 = vstv %s1592
    %v1594 = vmul.f32 %v1593, %v1568
    %v1595 = vmul.f32 %v1593, %v1569
    %v1596 = vmul.f32 %v1593, %v1570
    %v1597 = vmul.f32 %v1593, %v1571
    %v1598 = vadd.f32 %v1564, %v1594
    %v1599 = vadd.f32 %v1565, %v1595
    %v1600 = vadd.f32 %v1566, %v1596
    %v1601 = vadd.f32 %v1567, %v1597
    %s1602 = sld [smem:[#allocation2 + $0x19]]
    %v1603 = vstv %s1602
    %v1604 = vmul.f32 %v1603, %v1568
    %v1605 = vmul.f32 %v1603, %v1569
    %v1606 = vmul.f32 %v1603, %v1570
    %v1607 = vmul.f32 %v1603, %v1571
    %1612 = vrot.lane.b32.xlu0 %v1604, 127
    %v1613 = vpop.permute.xlu0 %1612
    %1614 = vrot.lane.b32.xlu0 %v1605, 127
    %v1615 = vpop.permute.xlu0 %1614
    %1616 = vrot.lane.b32.xlu0 %v1606, 127
    %v1617 = vpop.permute.xlu0 %1616
    %1618 = vrot.lane.b32.xlu0 %v1607, 127
    %v1619 = vpop.permute.xlu0 %1618
    %v1624 = vadd.f32 %v1578, %v1613
    %v1625 = vadd.f32 %v1579, %v1615
    %v1626 = vadd.f32 %v1580, %v1617
    %v1627 = vadd.f32 %v1581, %v1619
    %s1628 = sld [smem:[#allocation2 + $0x3d]]
    %v1629 = vstv %s1628
    %v1630 = vmul.f32 %v1629, %v1568
    %v1631 = vmul.f32 %v1629, %v1569
    %v1632 = vmul.f32 %v1629, %v1570
    %v1633 = vmul.f32 %v1629, %v1571
    %1638 = vrot.lane.b32.xlu0 %v1630, 127
    %v1639 = vpop.permute.xlu0 %1638
    %1640 = vrot.lane.b32.xlu0 %v1631, 127
    %v1641 = vpop.permute.xlu0 %1640
    %1642 = vrot.lane.b32.xlu0 %v1632, 127
    %v1643 = vpop.permute.xlu0 %1642
    %1644 = vrot.lane.b32.xlu0 %v1633, 127
    %v1645 = vpop.permute.xlu0 %1644
    %v1650 = vadd.f32 %v1588, %v1639
    %v1651 = vadd.f32 %v1589, %v1641
    %v1652 = vadd.f32 %v1590, %v1643
    %v1653 = vadd.f32 %v1591, %v1645
    %s1654 = sld [smem:[#allocation2 + $0x61]]
    %v1655 = vstv %s1654
    %v1656 = vmul.f32 %v1655, %v1568
    %v1657 = vmul.f32 %v1655, %v1569
    %v1658 = vmul.f32 %v1655, %v1570
    %v1659 = vmul.f32 %v1655, %v1571
    %1664 = vrot.lane.b32.xlu0 %v1656, 127
    %v1665 = vpop.permute.xlu0 %1664
    %1666 = vrot.lane.b32.xlu0 %v1657, 127
    %v1667 = vpop.permute.xlu0 %1666
    %1668 = vrot.lane.b32.xlu0 %v1658, 127
    %v1669 = vpop.permute.xlu0 %1668
    %1670 = vrot.lane.b32.xlu0 %v1659, 127
    %v1671 = vpop.permute.xlu0 %1670
    %v1676 = vadd.f32 %v1598, %v1665
    %v1677 = vadd.f32 %v1599, %v1667
    %v1678 = vadd.f32 %v1600, %v1669
    %v1679 = vadd.f32 %v1601, %v1671
    %s1680 = sld [smem:[#allocation2 + $0x1a]]
    %v1681 = vstv %s1680
    %v1682 = vmul.f32 %v1681, %v1568
    %v1683 = vmul.f32 %v1681, %v1569
    %v1684 = vmul.f32 %v1681, %v1570
    %v1685 = vmul.f32 %v1681, %v1571
    %1690 = vrot.lane.b32.xlu0 %v1682, 126
    %v1691 = vpop.permute.xlu0 %1690
    %1692 = vrot.lane.b32.xlu0 %v1683, 126
    %v1693 = vpop.permute.xlu0 %1692
    %1694 = vrot.lane.b32.xlu0 %v1684, 126
    %v1695 = vpop.permute.xlu0 %1694
    %1696 = vrot.lane.b32.xlu0 %v1685, 126
    %v1697 = vpop.permute.xlu0 %1696
    %v1702 = vadd.f32 %v1624, %v1691
    %v1703 = vadd.f32 %v1625, %v1693
    %v1704 = vadd.f32 %v1626, %v1695
    %v1705 = vadd.f32 %v1627, %v1697
    %s1706 = sld [smem:[#allocation2 + $0x3e]]
    %v1707 = vstv %s1706
    %v1708 = vmul.f32 %v1707, %v1568
    %v1709 = vmul.f32 %v1707, %v1569
    %v1710 = vmul.f32 %v1707, %v1570
    %v1711 = vmul.f32 %v1707, %v1571
    %1716 = vrot.lane.b32.xlu0 %v1708, 126
    %v1717 = vpop.permute.xlu0 %1716
    %1718 = vrot.lane.b32.xlu0 %v1709, 126
    %v1719 = vpop.permute.xlu0 %1718
    %1720 = vrot.lane.b32.xlu0 %v1710, 126
    %v1721 = vpop.permute.xlu0 %1720
    %1722 = vrot.lane.b32.xlu0 %v1711, 126
    %v1723 = vpop.permute.xlu0 %1722
    %v1728 = vadd.f32 %v1650, %v1717
    %v1729 = vadd.f32 %v1651, %v1719
    %v1730 = vadd.f32 %v1652, %v1721
    %v1731 = vadd.f32 %v1653, %v1723
    %s1732 = sld [smem:[#allocation2 + $0x62]]
    %v1733 = vstv %s1732
    %v1734 = vmul.f32 %v1733, %v1568
    %v1735 = vmul.f32 %v1733, %v1569
    %v1736 = vmul.f32 %v1733, %v1570
    %v1737 = vmul.f32 %v1733, %v1571
    %1742 = vrot.lane.b32.xlu0 %v1734, 126
    %v1743 = vpop.permute.xlu0 %1742
    %1744 = vrot.lane.b32.xlu0 %v1735, 126
    %v1745 = vpop.permute.xlu0 %1744
    %1746 = vrot.lane.b32.xlu0 %v1736, 126
    %v1747 = vpop.permute.xlu0 %1746
    %1748 = vrot.lane.b32.xlu0 %v1737, 126
    %v1749 = vpop.permute.xlu0 %1748
    %v1754 = vadd.f32 %v1676, %v1743
    %v1755 = vadd.f32 %v1677, %v1745
    %v1756 = vadd.f32 %v1678, %v1747
    %v1757 = vadd.f32 %v1679, %v1749
    %s1758 = scalar_lea.vmem %s0, 72
    %v1759 = vld [vmem:[%s1758] sm:$0xff]
    %v1760 = vld [vmem:[%s1758 + $0x8] sm:$0xff]
    %v1761 = vld [vmem:[%s1758 + $0x60] sm:$0xff]
    %v1762 = vld [vmem:[%s1758 + $0x68] sm:$0xff]
    %s1763 = sld [smem:[#allocation2 + $0x1b]]
    %v1764 = vstv %s1763
    %v1765 = vmul.f32 %v1764, %v1759
    %v1766 = vmul.f32 %v1764, %v1760
    %v1767 = vmul.f32 %v1764, %v1761
    %v1768 = vmul.f32 %v1764, %v1762
    %v1769 = vadd.f32 %v1702, %v1765
    %v1770 = vadd.f32 %v1703, %v1766
    %v1771 = vadd.f32 %v1704, %v1767
    %v1772 = vadd.f32 %v1705, %v1768
    %s1773 = sld [smem:[#allocation2 + $0x3f]]
    %v1774 = vstv %s1773
    %v1775 = vmul.f32 %v1774, %v1759
    %v1776 = vmul.f32 %v1774, %v1760
    %v1777 = vmul.f32 %v1774, %v1761
    %v1778 = vmul.f32 %v1774, %v1762
    %v1779 = vadd.f32 %v1728, %v1775
    %v1780 = vadd.f32 %v1729, %v1776
    %v1781 = vadd.f32 %v1730, %v1777
    %v1782 = vadd.f32 %v1731, %v1778
    %s1783 = sld [smem:[#allocation2 + $0x63]]
    %v1784 = vstv %s1783
    %v1785 = vmul.f32 %v1784, %v1759
    %v1786 = vmul.f32 %v1784, %v1760
    %v1787 = vmul.f32 %v1784, %v1761
    %v1788 = vmul.f32 %v1784, %v1762
    %v1789 = vadd.f32 %v1754, %v1785
    %v1790 = vadd.f32 %v1755, %v1786
    %v1791 = vadd.f32 %v1756, %v1787
    %v1792 = vadd.f32 %v1757, %v1788
    %s1793 = sld [smem:[#allocation2 + $0x1c]]
    %v1794 = vstv %s1793
    %v1795 = vmul.f32 %v1794, %v1759
    %v1796 = vmul.f32 %v1794, %v1760
    %v1797 = vmul.f32 %v1794, %v1761
    %v1798 = vmul.f32 %v1794, %v1762
    %1803 = vrot.lane.b32.xlu0 %v1795, 127
    %v1804 = vpop.permute.xlu0 %1803
    %1805 = vrot.lane.b32.xlu0 %v1796, 127
    %v1806 = vpop.permute.xlu0 %1805
    %1807 = vrot.lane.b32.xlu0 %v1797, 127
    %v1808 = vpop.permute.xlu0 %1807
    %1809 = vrot.lane.b32.xlu0 %v1798, 127
    %v1810 = vpop.permute.xlu0 %1809
    %v1815 = vadd.f32 %v1769, %v1804
    %v1816 = vadd.f32 %v1770, %v1806
    %v1817 = vadd.f32 %v1771, %v1808
    %v1818 = vadd.f32 %v1772, %v1810
    %s1819 = sld [smem:[#allocation2 + $0x40]]
    %v1820 = vstv %s1819
    %v1821 = vmul.f32 %v1820, %v1759
    %v1822 = vmul.f32 %v1820, %v1760
    %v1823 = vmul.f32 %v1820, %v1761
    %v1824 = vmul.f32 %v1820, %v1762
    %1829 = vrot.lane.b32.xlu0 %v1821, 127
    %v1830 = vpop.permute.xlu0 %1829
    %1831 = vrot.lane.b32.xlu0 %v1822, 127
    %v1832 = vpop.permute.xlu0 %1831
    %1833 = vrot.lane.b32.xlu0 %v1823, 127
    %v1834 = vpop.permute.xlu0 %1833
    %1835 = vrot.lane.b32.xlu0 %v1824, 127
    %v1836 = vpop.permute.xlu0 %1835
    %v1841 = vadd.f32 %v1779, %v1830
    %v1842 = vadd.f32 %v1780, %v1832
    %v1843 = vadd.f32 %v1781, %v1834
    %v1844 = vadd.f32 %v1782, %v1836
    %s1845 = sld [smem:[#allocation2 + $0x64]]
    %v1846 = vstv %s1845
    %v1847 = vmul.f32 %v1846, %v1759
    %v1848 = vmul.f32 %v1846, %v1760
    %v1849 = vmul.f32 %v1846, %v1761
    %v1850 = vmul.f32 %v1846, %v1762
    %1855 = vrot.lane.b32.xlu0 %v1847, 127
    %v1856 = vpop.permute.xlu0 %1855
    %1857 = vrot.lane.b32.xlu0 %v1848, 127
    %v1858 = vpop.permute.xlu0 %1857
    %1859 = vrot.lane.b32.xlu0 %v1849, 127
    %v1860 = vpop.permute.xlu0 %1859
    %1861 = vrot.lane.b32.xlu0 %v1850, 127
    %v1862 = vpop.permute.xlu0 %1861
    %v1867 = vadd.f32 %v1789, %v1856
    %v1868 = vadd.f32 %v1790, %v1858
    %v1869 = vadd.f32 %v1791, %v1860
    %v1870 = vadd.f32 %v1792, %v1862
    %s1871 = sld [smem:[#allocation2 + $0x1d]]
    %v1872 = vstv %s1871
    %v1873 = vmul.f32 %v1872, %v1759
    %v1874 = vmul.f32 %v1872, %v1760
    %v1875 = vmul.f32 %v1872, %v1761
    %v1876 = vmul.f32 %v1872, %v1762
    %1881 = vrot.lane.b32.xlu0 %v1873, 126
    %v1882 = vpop.permute.xlu0 %1881
    %1883 = vrot.lane.b32.xlu0 %v1874, 126
    %v1884 = vpop.permute.xlu0 %1883
    %1885 = vrot.lane.b32.xlu0 %v1875, 126
    %v1886 = vpop.permute.xlu0 %1885
    %1887 = vrot.lane.b32.xlu0 %v1876, 126
    %v1888 = vpop.permute.xlu0 %1887
    %v1893 = vadd.f32 %v1815, %v1882
    %v1894 = vadd.f32 %v1816, %v1884
    %v1895 = vadd.f32 %v1817, %v1886
    %v1896 = vadd.f32 %v1818, %v1888
    %s1897 = sld [smem:[#allocation2 + $0x41]]
    %v1898 = vstv %s1897
    %v1899 = vmul.f32 %v1898, %v1759
    %v1900 = vmul.f32 %v1898, %v1760
    %v1901 = vmul.f32 %v1898, %v1761
    %v1902 = vmul.f32 %v1898, %v1762
    %1907 = vrot.lane.b32.xlu0 %v1899, 126
    %v1908 = vpop.permute.xlu0 %1907
    %1909 = vrot.lane.b32.xlu0 %v1900, 126
    %v1910 = vpop.permute.xlu0 %1909
    %1911 = vrot.lane.b32.xlu0 %v1901, 126
    %v1912 = vpop.permute.xlu0 %1911
    %1913 = vrot.lane.b32.xlu0 %v1902, 126
    %v1914 = vpop.permute.xlu0 %1913
    %v1919 = vadd.f32 %v1841, %v1908
    %v1920 = vadd.f32 %v1842, %v1910
    %v1921 = vadd.f32 %v1843, %v1912
    %v1922 = vadd.f32 %v1844, %v1914
    %s1923 = sld [smem:[#allocation2 + $0x65]]
    %v1924 = vstv %s1923
    %v1925 = vmul.f32 %v1924, %v1759
    %v1926 = vmul.f32 %v1924, %v1760
    %v1927 = vmul.f32 %v1924, %v1761
    %v1928 = vmul.f32 %v1924, %v1762
    %1933 = vrot.lane.b32.xlu0 %v1925, 126
    %v1934 = vpop.permute.xlu0 %1933
    %1935 = vrot.lane.b32.xlu0 %v1926, 126
    %v1936 = vpop.permute.xlu0 %1935
    %1937 = vrot.lane.b32.xlu0 %v1927, 126
    %v1938 = vpop.permute.xlu0 %1937
    %1939 = vrot.lane.b32.xlu0 %v1928, 126
    %v1940 = vpop.permute.xlu0 %1939
    %v1945 = vadd.f32 %v1867, %v1934
    %v1946 = vadd.f32 %v1868, %v1936
    %v1947 = vadd.f32 %v1869, %v1938
    %v1948 = vadd.f32 %v1870, %v1940
    %v1949 = vld [vmem:[%s1758 + $0x1] sm:$0xff]
    %v1950 = vld [vmem:[%s1758 + $0x9] sm:$0xff]
    %v1951 = vld [vmem:[%s1758 + $0x61] sm:$0xff]
    %v1952 = vld [vmem:[%s1758 + $0x69] sm:$0xff]
    %s1953 = sld [smem:[#allocation2 + $0x1e]]
    %v1954 = vstv %s1953
    %v1955 = vmul.f32 %v1954, %v1949
    %v1956 = vmul.f32 %v1954, %v1950
    %v1957 = vmul.f32 %v1954, %v1951
    %v1958 = vmul.f32 %v1954, %v1952
    %v1959 = vadd.f32 %v1893, %v1955
    %v1960 = vadd.f32 %v1894, %v1956
    %v1961 = vadd.f32 %v1895, %v1957
    %v1962 = vadd.f32 %v1896, %v1958
    %s1963 = sld [smem:[#allocation2 + $0x42]]
    %v1964 = vstv %s1963
    %v1965 = vmul.f32 %v1964, %v1949
    %v1966 = vmul.f32 %v1964, %v1950
    %v1967 = vmul.f32 %v1964, %v1951
    %v1968 = vmul.f32 %v1964, %v1952
    %v1969 = vadd.f32 %v1919, %v1965
    %v1970 = vadd.f32 %v1920, %v1966
    %v1971 = vadd.f32 %v1921, %v1967
    %v1972 = vadd.f32 %v1922, %v1968
    %s1973 = sld [smem:[#allocation2 + $0x66]]
    %v1974 = vstv %s1973
    %v1975 = vmul.f32 %v1974, %v1949
    %v1976 = vmul.f32 %v1974, %v1950
    %v1977 = vmul.f32 %v1974, %v1951
    %v1978 = vmul.f32 %v1974, %v1952
    %v1979 = vadd.f32 %v1945, %v1975
    %v1980 = vadd.f32 %v1946, %v1976
    %v1981 = vadd.f32 %v1947, %v1977
    %v1982 = vadd.f32 %v1948, %v1978
    %s1983 = sld [smem:[#allocation2 + $0x1f]]
    %v1984 = vstv %s1983
    %v1985 = vmul.f32 %v1984, %v1949
    %v1986 = vmul.f32 %v1984, %v1950
    %v1987 = vmul.f32 %v1984, %v1951
    %v1988 = vmul.f32 %v1984, %v1952
    %1993 = vrot.lane.b32.xlu0 %v1985, 127
    %v1994 = vpop.permute.xlu0 %1993
    %1995 = vrot.lane.b32.xlu0 %v1986, 127
    %v1996 = vpop.permute.xlu0 %1995
    %1997 = vrot.lane.b32.xlu0 %v1987, 127
    %v1998 = vpop.permute.xlu0 %1997
    %1999 = vrot.lane.b32.xlu0 %v1988, 127
    %v2000 = vpop.permute.xlu0 %1999
    %v2005 = vadd.f32 %v1959, %v1994
    %v2006 = vadd.f32 %v1960, %v1996
    %v2007 = vadd.f32 %v1961, %v1998
    %v2008 = vadd.f32 %v1962, %v2000
    %s2009 = sld [smem:[#allocation2 + $0x43]]
    %v2010 = vstv %s2009
    %v2011 = vmul.f32 %v2010, %v1949
    %v2012 = vmul.f32 %v2010, %v1950
    %v2013 = vmul.f32 %v2010, %v1951
    %v2014 = vmul.f32 %v2010, %v1952
    %2019 = vrot.lane.b32.xlu0 %v2011, 127
    %v2020 = vpop.permute.xlu0 %2019
    %2021 = vrot.lane.b32.xlu0 %v2012, 127
    %v2022 = vpop.permute.xlu0 %2021
    %2023 = vrot.lane.b32.xlu0 %v2013, 127
    %v2024 = vpop.permute.xlu0 %2023
    %2025 = vrot.lane.b32.xlu0 %v2014, 127
    %v2026 = vpop.permute.xlu0 %2025
    %v2031 = vadd.f32 %v1969, %v2020
    %v2032 = vadd.f32 %v1970, %v2022
    %v2033 = vadd.f32 %v1971, %v2024
    %v2034 = vadd.f32 %v1972, %v2026
    %s2035 = sld [smem:[#allocation2 + $0x67]]
    %v2036 = vstv %s2035
    %v2037 = vmul.f32 %v2036, %v1949
    %v2038 = vmul.f32 %v2036, %v1950
    %v2039 = vmul.f32 %v2036, %v1951
    %v2040 = vmul.f32 %v2036, %v1952
    %2045 = vrot.lane.b32.xlu0 %v2037, 127
    %v2046 = vpop.permute.xlu0 %2045
    %2047 = vrot.lane.b32.xlu0 %v2038, 127
    %v2048 = vpop.permute.xlu0 %2047
    %2049 = vrot.lane.b32.xlu0 %v2039, 127
    %v2050 = vpop.permute.xlu0 %2049
    %2051 = vrot.lane.b32.xlu0 %v2040, 127
    %v2052 = vpop.permute.xlu0 %2051
    %v2057 = vadd.f32 %v1979, %v2046
    %v2058 = vadd.f32 %v1980, %v2048
    %v2059 = vadd.f32 %v1981, %v2050
    %v2060 = vadd.f32 %v1982, %v2052
    %s2061 = sld [smem:[#allocation2 + $0x20]]
    %v2062 = vstv %s2061
    %v2063 = vmul.f32 %v2062, %v1949
    %v2064 = vmul.f32 %v2062, %v1950
    %v2065 = vmul.f32 %v2062, %v1951
    %v2066 = vmul.f32 %v2062, %v1952
    %2071 = vrot.lane.b32.xlu0 %v2063, 126
    %v2072 = vpop.permute.xlu0 %2071
    %2073 = vrot.lane.b32.xlu0 %v2064, 126
    %v2074 = vpop.permute.xlu0 %2073
    %2075 = vrot.lane.b32.xlu0 %v2065, 126
    %v2076 = vpop.permute.xlu0 %2075
    %2077 = vrot.lane.b32.xlu0 %v2066, 126
    %v2078 = vpop.permute.xlu0 %2077
    %v2083 = vadd.f32 %v2005, %v2072
    %v2084 = vadd.f32 %v2006, %v2074
    %v2085 = vadd.f32 %v2007, %v2076
    %v2086 = vadd.f32 %v2008, %v2078
    %s2087 = sld [smem:[#allocation2 + $0x44]]
    %v2088 = vstv %s2087
    %v2089 = vmul.f32 %v2088, %v1949
    %v2090 = vmul.f32 %v2088, %v1950
    %v2091 = vmul.f32 %v2088, %v1951
    %v2092 = vmul.f32 %v2088, %v1952
    %2097 = vrot.lane.b32.xlu0 %v2089, 126
    %v2098 = vpop.permute.xlu0 %2097
    %2099 = vrot.lane.b32.xlu0 %v2090, 126
    %v2100 = vpop.permute.xlu0 %2099
    %2101 = vrot.lane.b32.xlu0 %v2091, 126
    %v2102 = vpop.permute.xlu0 %2101
    %2103 = vrot.lane.b32.xlu0 %v2092, 126
    %v2104 = vpop.permute.xlu0 %2103
    %v2109 = vadd.f32 %v2031, %v2098
    %v2110 = vadd.f32 %v2032, %v2100
    %v2111 = vadd.f32 %v2033, %v2102
    %v2112 = vadd.f32 %v2034, %v2104
    %s2113 = sld [smem:[#allocation2 + $0x68]]
    %v2114 = vstv %s2113
    %v2115 = vmul.f32 %v2114, %v1949
    %v2116 = vmul.f32 %v2114, %v1950
    %v2117 = vmul.f32 %v2114, %v1951
    %v2118 = vmul.f32 %v2114, %v1952
    %2123 = vrot.lane.b32.xlu0 %v2115, 126
    %v2124 = vpop.permute.xlu0 %2123
    %2125 = vrot.lane.b32.xlu0 %v2116, 126
    %v2126 = vpop.permute.xlu0 %2125
    %2127 = vrot.lane.b32.xlu0 %v2117, 126
    %v2128 = vpop.permute.xlu0 %2127
    %2129 = vrot.lane.b32.xlu0 %v2118, 126
    %v2130 = vpop.permute.xlu0 %2129
    %v2135 = vadd.f32 %v2057, %v2124
    %v2136 = vadd.f32 %v2058, %v2126
    %v2137 = vadd.f32 %v2059, %v2128
    %v2138 = vadd.f32 %v2060, %v2130
    %v2139 = vld [vmem:[%s1758 + $0x2] sm:$0xff]
    %v2140 = vld [vmem:[%s1758 + $0xa] sm:$0xff]
    %v2141 = vld [vmem:[%s1758 + $0x62] sm:$0xff]
    %v2142 = vld [vmem:[%s1758 + $0x6a] sm:$0xff]
    %s2143 = sld [smem:[#allocation2 + $0x21]]
    %v2144 = vstv %s2143
    %v2145 = vmul.f32 %v2144, %v2139
    %v2146 = vmul.f32 %v2144, %v2140
    %v2147 = vmul.f32 %v2144, %v2141
    %v2148 = vmul.f32 %v2144, %v2142
    %v2149 = vadd.f32 %v2083, %v2145
    %v2150 = vadd.f32 %v2084, %v2146
    %v2151 = vadd.f32 %v2085, %v2147
    %v2152 = vadd.f32 %v2086, %v2148
    %s2153 = sld [smem:[#allocation2 + $0x45]]
    %v2154 = vstv %s2153
    %v2155 = vmul.f32 %v2154, %v2139
    %v2156 = vmul.f32 %v2154, %v2140
    %v2157 = vmul.f32 %v2154, %v2141
    %v2158 = vmul.f32 %v2154, %v2142
    %v2159 = vadd.f32 %v2109, %v2155
    %v2160 = vadd.f32 %v2110, %v2156
    %v2161 = vadd.f32 %v2111, %v2157
    %v2162 = vadd.f32 %v2112, %v2158
    %s2163 = sld [smem:[#allocation2 + $0x69]]
    %v2164 = vstv %s2163
    %v2165 = vmul.f32 %v2164, %v2139
    %v2166 = vmul.f32 %v2164, %v2140
    %v2167 = vmul.f32 %v2164, %v2141
    %v2168 = vmul.f32 %v2164, %v2142
    %v2169 = vadd.f32 %v2135, %v2165
    %v2170 = vadd.f32 %v2136, %v2166
    %v2171 = vadd.f32 %v2137, %v2167
    %v2172 = vadd.f32 %v2138, %v2168
    %s2173 = sld [smem:[#allocation2 + $0x22]]
    %v2174 = vstv %s2173
    %v2175 = vmul.f32 %v2174, %v2139
    %v2176 = vmul.f32 %v2174, %v2140
    %v2177 = vmul.f32 %v2174, %v2141
    %v2178 = vmul.f32 %v2174, %v2142
    %2183 = vrot.lane.b32.xlu0 %v2175, 127
    %v2184 = vpop.permute.xlu0 %2183
    %2185 = vrot.lane.b32.xlu0 %v2176, 127
    %v2186 = vpop.permute.xlu0 %2185
    %2187 = vrot.lane.b32.xlu0 %v2177, 127
    %v2188 = vpop.permute.xlu0 %2187
    %2189 = vrot.lane.b32.xlu0 %v2178, 127
    %v2190 = vpop.permute.xlu0 %2189
    %v2195 = vadd.f32 %v2149, %v2184
    %v2196 = vadd.f32 %v2150, %v2186
    %v2197 = vadd.f32 %v2151, %v2188
    %v2198 = vadd.f32 %v2152, %v2190
    %s2199 = sld [smem:[#allocation2 + $0x46]]
    %v2200 = vstv %s2199
    %v2201 = vmul.f32 %v2200, %v2139
    %v2202 = vmul.f32 %v2200, %v2140
    %v2203 = vmul.f32 %v2200, %v2141
    %v2204 = vmul.f32 %v2200, %v2142
    %2209 = vrot.lane.b32.xlu0 %v2201, 127
    %v2210 = vpop.permute.xlu0 %2209
    %2211 = vrot.lane.b32.xlu0 %v2202, 127
    %v2212 = vpop.permute.xlu0 %2211
    %2213 = vrot.lane.b32.xlu0 %v2203, 127
    %v2214 = vpop.permute.xlu0 %2213
    %2215 = vrot.lane.b32.xlu0 %v2204, 127
    %v2216 = vpop.permute.xlu0 %2215
    %v2221 = vadd.f32 %v2159, %v2210
    %v2222 = vadd.f32 %v2160, %v2212
    %v2223 = vadd.f32 %v2161, %v2214
    %v2224 = vadd.f32 %v2162, %v2216
    %s2225 = sld [smem:[#allocation2 + $0x6a]]
    %v2226 = vstv %s2225
    %v2227 = vmul.f32 %v2226, %v2139
    %v2228 = vmul.f32 %v2226, %v2140
    %v2229 = vmul.f32 %v2226, %v2141
    %v2230 = vmul.f32 %v2226, %v2142
    %2235 = vrot.lane.b32.xlu0 %v2227, 127
    %v2236 = vpop.permute.xlu0 %2235
    %2237 = vrot.lane.b32.xlu0 %v2228, 127
    %v2238 = vpop.permute.xlu0 %2237
    %2239 = vrot.lane.b32.xlu0 %v2229, 127
    %v2240 = vpop.permute.xlu0 %2239
    %2241 = vrot.lane.b32.xlu0 %v2230, 127
    %v2242 = vpop.permute.xlu0 %2241
    %v2247 = vadd.f32 %v2169, %v2236
    %v2248 = vadd.f32 %v2170, %v2238
    %v2249 = vadd.f32 %v2171, %v2240
    %v2250 = vadd.f32 %v2172, %v2242
    %s2251 = sld [smem:[#allocation2 + $0x23]]
    %v2252 = vstv %s2251
    %v2253 = vmul.f32 %v2252, %v2139
    %v2254 = vmul.f32 %v2252, %v2140
    %v2255 = vmul.f32 %v2252, %v2141
    %v2256 = vmul.f32 %v2252, %v2142
    %2261 = vrot.lane.b32.xlu0 %v2253, 126
    %v2262 = vpop.permute.xlu0 %2261
    %2263 = vrot.lane.b32.xlu0 %v2254, 126
    %v2264 = vpop.permute.xlu0 %2263
    %2265 = vrot.lane.b32.xlu0 %v2255, 126
    %v2266 = vpop.permute.xlu0 %2265
    %2267 = vrot.lane.b32.xlu0 %v2256, 126
    %v2268 = vpop.permute.xlu0 %2267
    %v2273 = vadd.f32 %v2195, %v2262
    %v2274 = vadd.f32 %v2196, %v2264
    %v2275 = vadd.f32 %v2197, %v2266
    %v2276 = vadd.f32 %v2198, %v2268
    %s2277 = sld [smem:[#allocation2 + $0x47]]
    %v2278 = vstv %s2277
    %v2279 = vmul.f32 %v2278, %v2139
    %v2280 = vmul.f32 %v2278, %v2140
    %v2281 = vmul.f32 %v2278, %v2141
    %v2282 = vmul.f32 %v2278, %v2142
    %2287 = vrot.lane.b32.xlu0 %v2279, 126
    %v2288 = vpop.permute.xlu0 %2287
    %2289 = vrot.lane.b32.xlu0 %v2280, 126
    %v2290 = vpop.permute.xlu0 %2289
    %2291 = vrot.lane.b32.xlu0 %v2281, 126
    %v2292 = vpop.permute.xlu0 %2291
    %2293 = vrot.lane.b32.xlu0 %v2282, 126
    %v2294 = vpop.permute.xlu0 %2293
    %v2299 = vadd.f32 %v2221, %v2288
    %v2300 = vadd.f32 %v2222, %v2290
    %v2301 = vadd.f32 %v2223, %v2292
    %v2302 = vadd.f32 %v2224, %v2294
    %s2303 = sld [smem:[#allocation2 + $0x6b]]
    %v2304 = vstv %s2303
    %v2305 = vmul.f32 %v2304, %v2139
    %v2306 = vmul.f32 %v2304, %v2140
    %v2307 = vmul.f32 %v2304, %v2141
    %v2308 = vmul.f32 %v2304, %v2142
    %2313 = vrot.lane.b32.xlu0 %v2305, 126
    %v2314 = vpop.permute.xlu0 %2313
    %2315 = vrot.lane.b32.xlu0 %v2306, 126
    %v2316 = vpop.permute.xlu0 %2315
    %2317 = vrot.lane.b32.xlu0 %v2307, 126
    %v2318 = vpop.permute.xlu0 %2317
    %2319 = vrot.lane.b32.xlu0 %v2308, 126
    %v2320 = vpop.permute.xlu0 %2319
    %v2325 = vadd.f32 %v2247, %v2314
    %v2326 = vadd.f32 %v2248, %v2316
    %v2327 = vadd.f32 %v2249, %v2318
    %v2328 = vadd.f32 %v2250, %v2320
    %vm2329 = vcmask 130048
    %2330 = vst.msk [vmem:[#allocation7] sm:$0xff] %vm2329, %v2273
    %2331 = vst.msk [vmem:[#allocation7 + $0x8] sm:$0xff] %vm2329, %v2274
    %2332 = vst.msk [vmem:[#allocation7 + $0x30] sm:$0xff] %vm2329, %v2275
    %2333 = vst.msk [vmem:[#allocation7 + $0x38] sm:$0xff] %vm2329, %v2276
    %s2334 = scalar_lea.vmem [#allocation7], 16
    %2335 = vst.msk [vmem:[%s2334] sm:$0xff] %vm2329, %v2299
    %2336 = vst.msk [vmem:[%s2334 + $0x8] sm:$0xff] %vm2329, %v2300
    %2337 = vst.msk [vmem:[%s2334 + $0x30] sm:$0xff] %vm2329, %v2301
    %2338 = vst.msk [vmem:[%s2334 + $0x38] sm:$0xff] %vm2329, %v2302
    %s2339 = scalar_lea.vmem [#allocation7], 32
    %2340 = vst.msk [vmem:[%s2339] sm:$0xff] %vm2329, %v2325
    %2341 = vst.msk [vmem:[%s2339 + $0x8] sm:$0xff] %vm2329, %v2326
    %2342 = vst.msk [vmem:[%s2339 + $0x30] sm:$0xff] %vm2329, %v2327
    %2343 = vst.msk [vmem:[%s2339 + $0x38] sm:$0xff] %vm2329, %v2328
    // Predicated region
    $region22: #{tpu_custom_call.1} parent=1 // pred_check
      _
    $region23: #{tpu_custom_call.1} parent=1 // pred_check_branch
      %2345 = sbr.rel (0) target = $region25
    $region24: #{tpu_custom_call.1} parent=1 // pred_region
      %2347 = vsyncadd [#allocation3], 0
      %s2348 = sshll.u32 [#allocation7], 4
      %s2349 = int_to_ptr.vmem [resolvable:$true] %s2348
      %s2350 = sshll.u32 %s3, 4
      %s2351 = int_to_ptr.hbm [resolvable:$true] %s2350
      %2356 = dma.vmem_to_hbm [thread:$0]  %s2349, 1536, %s2351, [#allocation3], 128, 128, 8
    $region25: #{tpu_custom_call.1} parent=1 // pred_fallthru
      _
    // Predicated region
    $region26: #{tpu_custom_call.1} parent=1 // pred_check
      _
    $region27: #{tpu_custom_call.1} parent=1 // pred_check_branch
      %2358 = sbr.rel (0) target = $region29
    $region28: #{tpu_custom_call.1} parent=1 // pred_region
      %2360 = dma.done [#allocation3], 1536
    $region29: #{tpu_custom_call.1} parent=1 // pred_fallthru
      _
    %2361 = vsyncpa [#allocation3], 1
    %2362 = vsyncpa [#allocation4], 1
    %2363 = vsyncpa [#allocation6], 1

</llo_original>
